<compile_context>
chip_gen: v5e
topology: v5e:2x2
jax: 0.10.0
libtpu: 0.0.40
codegen_flags: <defaults>
</compile_context>

<pallas_src>
import numpy as np
import jax
import jax.numpy as jnp
from jax import lax
from jax.experimental import pallas as pl
from jax.experimental.pallas import tpu as pltpu

EPS = 1e-5


def _tap_offsets(wp):
    return [dy * wp + dx for dy in range(3) for dx in range(3)]


def _vmem_limit(bytes_estimate):
    # Inputs/outputs are double-buffered by the pipeline (already ~included in
    # the caller's estimate); add headroom and clamp to a value that is legal
    # on every generation (v7x physical VMEM = 64 MiB).
    return int(min(max(2 * bytes_estimate, 32 * 1024 * 1024), 60 * 1024 * 1024))


# ---------------------------------------------------------------------------
# Kernel A: conv1 (in-kernel im2col -> one wide bf16 MXU matmul) + partial
#           per-image BN statistics.
# ---------------------------------------------------------------------------
def _make_conv_stats_kernel(c, wp, L):
    offs = _tap_offsets(wp)

    def kernel(x_ref, w_ref, mask_ref, y_ref, st_ref, p_ref):
        # Build the 9-tap im2col slab in VMEM (static slices, no HBM traffic).
        for t, off in enumerate(offs):
            p_ref[t * c:(t + 1) * c, :] = x_ref[0, :, off:off + L]
        # One wide MXU matmul: [Cout, 9C] (bf16) @ [9C, L] (bf16) -> f32.
        y = jnp.dot(w_ref[...], p_ref[...], preferred_element_type=jnp.float32)
        y_ref[0] = y
        # Partial BN statistics for this image (pad columns masked out).
        ym = y * mask_ref[...]
        st_ref[0] = jnp.concatenate(
            [jnp.sum(ym, axis=1, keepdims=True),
             jnp.sum(ym * y, axis=1, keepdims=True)], axis=1)

    return kernel


# ---------------------------------------------------------------------------
# Kernel B: fused bn1-apply + ReLU  ->  conv2 (in-kernel im2col, bf16 MXU)
#           + partial per-image BN statistics.  z1 never hits HBM.
# ---------------------------------------------------------------------------
def _make_bn_relu_conv_stats_kernel(c, wp, L, inv_m):
    offs = _tap_offsets(wp)
    interior = wp + 1  # flat offset of padded pixel (1, 1)

    def kernel(y1_ref, st1_ref, g1_ref, b1_ref, mask_ref, w2_ref,
               y2_ref, st2_ref, zbuf_ref, p_ref):
        # Fold bn1 scale/shift from the (tiny) global stats.
        st = st1_ref[...]                              # [C, 2]
        mean = st[:, 0:1] * inv_m
        var = st[:, 1:2] * inv_m - mean * mean         # biased batch variance
        scale = g1_ref[...] * lax.rsqrt(var + EPS)
        shift = b1_ref[...] - mean * scale
        mask = mask_ref[...]                           # [1, L]

        # bn1 + ReLU; pad columns forced back to zero (they become conv2's
        # zero padding when re-embedded into the padded buffer below).
        z = jnp.maximum(y1_ref[0] * scale + shift, 0.0) * mask   # [C, L] f32

        # Re-embed into a zero padded flat buffer (conv2's padded input).
        zbuf_ref[...] = jnp.zeros_like(zbuf_ref)
        zbuf_ref[:, interior:interior + L] = z.astype(zbuf_ref.dtype)

        # im2col slab + one wide MXU matmul for conv2.
        for t, off in enumerate(offs):
            p_ref[t * c:(t + 1) * c, :] = zbuf_ref[:, off:off + L]
        y2 = jnp.dot(w2_ref[...], p_ref[...], preferred_element_type=jnp.float32)
        y2_ref[0] = y2
        ym = y2 * mask
        st2_ref[0] = jnp.concatenate(
            [jnp.sum(ym, axis=1, keepdims=True),
             jnp.sum(ym * y2, axis=1, keepdims=True)], axis=1)

    return kernel


# ---------------------------------------------------------------------------
# Kernel C: bn2 fold/apply + residual add + ReLU (lane-dense elementwise).
# ---------------------------------------------------------------------------
def _make_bn_res_relu_kernel(inv_m):
    def kernel(y_ref, st_ref, g_ref, b_ref, id_ref, o_ref):
        st = st_ref[...]
        mean = st[:, 0:1] * inv_m
        var = st[:, 1:2] * inv_m - mean * mean
        scale = g_ref[...] * lax.rsqrt(var + EPS)
        shift = b_ref[...] - mean * scale
        o_ref[0] = jnp.maximum(y_ref[0] * scale + shift + id_ref[0], 0.0)

    return kernel


# ---------------------------------------------------------------------------
# Wrapper: cheap layout plumbing only (pads / reshapes / tiny stat folds).
# ---------------------------------------------------------------------------
def _weights_to_2d(w_oihw):
    """OIHW [Cout, Cin, 3, 3] -> [Cout, 9*Cin] matching the tap/row order."""
    cout, cin = w_oihw.shape[0], w_oihw.shape[1]
    return jnp.transpose(w_oihw, (0, 2, 3, 1)).reshape(cout, 9 * cin)


def _basic_block_impl(x, w1, g1, b1, w2, g2, b2):
    n, c, h, w = x.shape
    cout = w1.shape[0]
    assert cout == c and w2.shape[0] == c, \
        "BasicBlock with downsample=None requires inplanes == planes"

    wp = w + 2
    L = h * wp                      # flat output length per image (incl. 2 pad cols/row)
    lbuf = L + 2 * wp + 2           # padded flat input length (covers the largest tap slice)
    inv_m = 1.0 / float(n * h * w)  # BN denominator: valid pixels only
    k9 = 9 * c

    xf32 = x.astype(jnp.float32)
    # conv input: zero-padded spatially, flattened row-major (row stride Wp),
    # plus a 2-element zero tail so every tap slice stays in bounds.  bf16.
    xp = jnp.pad(xf32, ((0, 0), (0, 0), (1, 1), (1, 1))).reshape(n, c, (h + 2) * wp)
    xp = jnp.pad(xp, ((0, 0), (0, 0), (0, lbuf - (h + 2) * wp))).astype(jnp.bfloat16)
    # identity in the same flat layout (2 trailing zero columns per row), f32.
    idw = jnp.pad(xf32, ((0, 0), (0, 0), (0, 0), (0, 2))).reshape(n, c, L)
    # valid-column mask (excludes the 2 pad columns per row).
    mask = (jnp.arange(L, dtype=jnp.int32) % wp < w).astype(jnp.float32).reshape(1, L)

    w1_2d = _weights_to_2d(w1.astype(jnp.float32)).astype(jnp.bfloat16)
    w2_2d = _weights_to_2d(w2.astype(jnp.float32)).astype(jnp.bfloat16)
    g1_ = g1.reshape(c, 1).astype(jnp.float32)
    b1_ = b1.reshape(c, 1).astype(jnp.float32)
    g2_ = g2.reshape(c, 1).astype(jnp.float32)
    b2_ = b2.reshape(c, 1).astype(jnp.float32)

    # ---- conv1 + partial stats (grid over batch, fully "parallel") --------
    foot_a = 2 * (c * lbuf * 2 + cout * k9 * 2 + L * 4 + cout * L * 4 + cout * 8) \
        + k9 * L * 2
    y1, st1 = pl.pallas_call(
        _make_conv_stats_kernel(c, wp, L),
        out_shape=(jax.ShapeDtypeStruct((n, cout, L), jnp.float32),
                   jax.ShapeDtypeStruct((n, cout, 2), jnp.float32)),
        grid=(n,),
        in_specs=[pl.BlockSpec((1, c, lbuf), lambda i: (i, 0, 0)),
                  pl.BlockSpec((cout, k9), lambda i: (0, 0)),
                  pl.BlockSpec((1, L), lambda i: (0, 0))],
        out_specs=(pl.BlockSpec((1, cout, L), lambda i: (i, 0, 0)),
                   pl.BlockSpec((1, cout, 2), lambda i: (i, 0, 0))),
        scratch_shapes=[pltpu.VMEM((k9, L), jnp.bfloat16)],
        compiler_params=pltpu.CompilerParams(
            dimension_semantics=("parallel",),
            vmem_limit_bytes=_vmem_limit(foot_a)),
    )(xp, w1_2d, mask)
    st1_tot = jnp.sum(st1, axis=0)            # [C, 2] (tiny XLA fold of partials)

    # ---- bn1+relu fused into conv2 + partial stats -------------------------
    foot_b = 2 * (cout * L * 4 + c * 8 + 2 * c * 4 + L * 4 + cout * k9 * 2
                  + cout * L * 4 + cout * 8) + c * lbuf * 2 + k9 * L * 2
    y2, st2 = pl.pallas_call(
        _make_bn_relu_conv_stats_kernel(c, wp, L, inv_m),
        out_shape=(jax.ShapeDtypeStruct((n, cout, L), jnp.float32),
                   jax.ShapeDtypeStruct((n, cout, 2), jnp.float32)),
        grid=(n,),
        in_specs=[pl.BlockSpec((1, c, L), lambda i: (i, 0, 0)),
                  pl.BlockSpec((c, 2), lambda i: (0, 0)),
                  pl.BlockSpec((c, 1), lambda i: (0, 0)),
                  pl.BlockSpec((c, 1), lambda i: (0, 0)),
                  pl.BlockSpec((1, L), lambda i: (0, 0)),
                  pl.BlockSpec((cout, k9), lambda i: (0, 0))],
        out_specs=(pl.BlockSpec((1, cout, L), lambda i: (i, 0, 0)),
                   pl.BlockSpec((1, cout, 2), lambda i: (i, 0, 0))),
        scratch_shapes=[pltpu.VMEM((c, lbuf), jnp.bfloat16),
                        pltpu.VMEM((k9, L), jnp.bfloat16)],
        compiler_params=pltpu.CompilerParams(
            dimension_semantics=("parallel",),
            vmem_limit_bytes=_vmem_limit(foot_b)),
    )(y1, st1_tot, g1_, b1_, mask, w2_2d)
    st2_tot = jnp.sum(st2, axis=0)

    # ---- bn2 + residual + relu ---------------------------------------------
    foot_c = 2 * (3 * c * L * 4 + c * 8 + 2 * c * 4)
    out_flat = pl.pallas_call(
        _make_bn_res_relu_kernel(inv_m),
        out_shape=jax.ShapeDtypeStruct((n, c, L), jnp.float32),
        grid=(n,),
        in_specs=[pl.BlockSpec((1, c, L), lambda i: (i, 0, 0)),
                  pl.BlockSpec((c, 2), lambda i: (0, 0)),
                  pl.BlockSpec((c, 1), lambda i: (0, 0)),
                  pl.BlockSpec((c, 1), lambda i: (0, 0)),
                  pl.BlockSpec((1, c, L), lambda i: (i, 0, 0))],
        out_specs=pl.BlockSpec((1, c, L), lambda i: (i, 0, 0)),
        compiler_params=pltpu.CompilerParams(
            dimension_semantics=("parallel",),
            vmem_limit_bytes=_vmem_limit(foot_c)),
    )(y2, st2_tot, g2_, b2_, idw)

    # Strip the 2 pad columns per row -> NCHW.
    return out_flat.reshape(n, c, h, wp)[:, :, :, :w]


basic_block = jax.jit(_basic_block_impl)


def reference_basic_block(x, w1, g1, b1, w2, g2, b2):
    """Pure-JAX NCHW reference matching PyTorch BasicBlock.forward (training BN)."""
    def conv(x, w):
        return lax.conv_general_dilated(
            x, w, window_strides=(1, 1), padding=((1, 1), (1, 1)),
            dimension_numbers=("NCHW", "OIHW", "NCHW"),
            precision=lax.Precision.HIGHEST)

    def bn(x, g, b):
        mean = x.mean(axis=(0, 2, 3), keepdims=True)
        var = ((x - mean) ** 2).mean(axis=(0, 2, 3), keepdims=True)
        return (x - mean) * (g.reshape(1, -1, 1, 1) * lax.rsqrt(var + EPS)) \
            + b.reshape(1, -1, 1, 1)

    out = jax.nn.relu(bn(conv(x, w1), g1, b1))
    out = bn(conv(out, w2), g2, b2)
    return jax.nn.relu(out + x)


if __name__ == "__main__":
    N, C, H, W = 2, 4, 16, 16  # inplanes = planes = 4, stride = 1

    key = jax.random.PRNGKey(0)
    kx, k1, k2, kg1, kb1, kg2, kb2 = jax.random.split(key, 7)

    x = jax.random.normal(kx, (N, C, H, W), dtype=jnp.float32)
    w1 = jax.random.normal(k1, (C, C, 3, 3), dtype=jnp.float32) * 0.1
    w2 = jax.random.normal(k2, (C, C, 3, 3), dtype=jnp.float32) * 0.1
    g1 = 1.0 + 0.1 * jax.random.normal(kg1, (C,), dtype=jnp.float32)
    b1 = 0.1 * jax.random.normal(kb1, (C,), dtype=jnp.float32)
    g2 = 1.0 + 0.1 * jax.random.normal(kg2, (C,), dtype=jnp.float32)
    b2 = 0.1 * jax.random.normal(kb2, (C,), dtype=jnp.float32)

    out = jax.block_until_ready(basic_block(x, w1, g1, b1, w2, g2, b2))
    ref = jax.block_until_ready(reference_basic_block(x, w1, g1, b1, w2, g2, b2))

    # bf16 MXU operands (vs. the f32 reference) introduce ~1e-2-level drift
    # after two convs + two BN normalizations; structural bugs are O(1).
    np.testing.assert_allclose(np.asarray(out), np.asarray(ref),
                               rtol=5e-2, atol=5e-2)

    print("KERNEL_OK")
</pallas_src>

<mosaic_0001>
module attributes {stable_mosaic.version = 11 : i64} {
  func.func @kernel(%arg0: i32, %arg1: memref<1x4x326xbf16, #tpu.memory_space<vmem>>, %arg2: memref<4x36xbf16, #tpu.memory_space<vmem>>, %arg3: memref<1x288xf32, #tpu.memory_space<vmem>>, %arg4: memref<1x4x288xf32, #tpu.memory_space<vmem>>, %arg5: memref<1x4x2xf32, #tpu.memory_space<vmem>>, %arg6: memref<36x288xbf16, #tpu.memory_space<vmem>>) attributes {dimension_semantics = [#tpu.dimension_semantics<parallel>], iteration_bounds = array<i64: 2>, scalar_prefetch = 0 : i64, scratch_operands = 1 : i64, tpu.core_type = #tpu.core_type<tc>, window_params = [{transform_indices = @transform_0, window_bounds = array<i64: 1, 4, 326>}, {pipeline_mode = #tpu.pipeline_mode<synchronous>, transform_indices = @transform_1, window_bounds = array<i64: 4, 36>}, {pipeline_mode = #tpu.pipeline_mode<synchronous>, transform_indices = @transform_2, window_bounds = array<i64: 1, 288>}, {transform_indices = @transform_3, window_bounds = array<i64: 1, 4, 288>}, {transform_indices = @transform_4, window_bounds = array<i64: 1, 4, 2>}]} {
    %c0 = arith.constant 0 : index
    %c0_0 = arith.constant 0 : index
    %c0_1 = arith.constant 0 : index
    %0 = vector.load %arg1[%c0, %c0_0, %c0_1] : memref<1x4x326xbf16, #tpu.memory_space<vmem>>, vector<1x4x288xbf16>
    %1 = vector.shape_cast %0 : vector<1x4x288xbf16> to vector<4x288xbf16>
    %c0_2 = arith.constant 0 : index
    %c0_3 = arith.constant 0 : index
    %2 = vector.load %arg6[%c0_2, %c0_3] : memref<36x288xbf16, #tpu.memory_space<vmem>>, vector<4x288xbf16>
    tpu.vector_store %arg6[%c0_2, %c0_3], %1 {strides = array<i32>} : memref<36x288xbf16, #tpu.memory_space<vmem>>, vector<4x288xbf16>,
    %c0_4 = arith.constant 0 : index
    %c0_5 = arith.constant 0 : index
    %c1 = arith.constant 1 : index
    %3 = vector.load %arg1[%c0_4, %c0_5, %c1] : memref<1x4x326xbf16, #tpu.memory_space<vmem>>, vector<1x4x288xbf16>
    %4 = vector.shape_cast %3 : vector<1x4x288xbf16> to vector<4x288xbf16>
    %c4 = arith.constant 4 : index
    %c0_6 = arith.constant 0 : index
    %5 = vector.load %arg6[%c4, %c0_6] : memref<36x288xbf16, #tpu.memory_space<vmem>>, vector<4x288xbf16>
    tpu.vector_store %arg6[%c4, %c0_6], %4 {strides = array<i32>} : memref<36x288xbf16, #tpu.memory_space<vmem>>, vector<4x288xbf16>,
    %c0_7 = arith.constant 0 : index
    %c0_8 = arith.constant 0 : index
    %c2 = arith.constant 2 : index
    %6 = vector.load %arg1[%c0_7, %c0_8, %c2] : memref<1x4x326xbf16, #tpu.memory_space<vmem>>, vector<1x4x288xbf16>
    %7 = vector.shape_cast %6 : vector<1x4x288xbf16> to vector<4x288xbf16>
    %c8 = arith.constant 8 : index
    %c0_9 = arith.constant 0 : index
    %8 = vector.load %arg6[%c8, %c0_9] : memref<36x288xbf16, #tpu.memory_space<vmem>>, vector<4x288xbf16>
    tpu.vector_store %arg6[%c8, %c0_9], %7 {strides = array<i32>} : memref<36x288xbf16, #tpu.memory_space<vmem>>, vector<4x288xbf16>,
    %c0_10 = arith.constant 0 : index
    %c0_11 = arith.constant 0 : index
    %c18 = arith.constant 18 : index
    %9 = vector.load %arg1[%c0_10, %c0_11, %c18] : memref<1x4x326xbf16, #tpu.memory_space<vmem>>, vector<1x4x288xbf16>
    %10 = vector.shape_cast %9 : vector<1x4x288xbf16> to vector<4x288xbf16>
    %c12 = arith.constant 12 : index
    %c0_12 = arith.constant 0 : index
    %11 = vector.load %arg6[%c12, %c0_12] : memref<36x288xbf16, #tpu.memory_space<vmem>>, vector<4x288xbf16>
    tpu.vector_store %arg6[%c12, %c0_12], %10 {strides = array<i32>} : memref<36x288xbf16, #tpu.memory_space<vmem>>, vector<4x288xbf16>,
    %c0_13 = arith.constant 0 : index
    %c0_14 = arith.constant 0 : index
    %c19 = arith.constant 19 : index
    %12 = vector.load %arg1[%c0_13, %c0_14, %c19] : memref<1x4x326xbf16, #tpu.memory_space<vmem>>, vector<1x4x288xbf16>
    %13 = vector.shape_cast %12 : vector<1x4x288xbf16> to vector<4x288xbf16>
    %c16 = arith.constant 16 : index
    %c0_15 = arith.constant 0 : index
    %14 = vector.load %arg6[%c16, %c0_15] : memref<36x288xbf16, #tpu.memory_space<vmem>>, vector<4x288xbf16>
    tpu.vector_store %arg6[%c16, %c0_15], %13 {strides = array<i32>} : memref<36x288xbf16, #tpu.memory_space<vmem>>, vector<4x288xbf16>,
    %c0_16 = arith.constant 0 : index
    %c0_17 = arith.constant 0 : index
    %c20 = arith.constant 20 : index
    %15 = vector.load %arg1[%c0_16, %c0_17, %c20] : memref<1x4x326xbf16, #tpu.memory_space<vmem>>, vector<1x4x288xbf16>
    %16 = vector.shape_cast %15 : vector<1x4x288xbf16> to vector<4x288xbf16>
    %c20_18 = arith.constant 20 : index
    %c0_19 = arith.constant 0 : index
    %17 = vector.load %arg6[%c20_18, %c0_19] : memref<36x288xbf16, #tpu.memory_space<vmem>>, vector<4x288xbf16>
    tpu.vector_store %arg6[%c20_18, %c0_19], %16 {strides = array<i32>} : memref<36x288xbf16, #tpu.memory_space<vmem>>, vector<4x288xbf16>,
    %c0_20 = arith.constant 0 : index
    %c0_21 = arith.constant 0 : index
    %c36 = arith.constant 36 : index
    %18 = vector.load %arg1[%c0_20, %c0_21, %c36] : memref<1x4x326xbf16, #tpu.memory_space<vmem>>, vector<1x4x288xbf16>
    %19 = vector.shape_cast %18 : vector<1x4x288xbf16> to vector<4x288xbf16>
    %c24 = arith.constant 24 : index
    %c0_22 = arith.constant 0 : index
    %20 = vector.load %arg6[%c24, %c0_22] : memref<36x288xbf16, #tpu.memory_space<vmem>>, vector<4x288xbf16>
    tpu.vector_store %arg6[%c24, %c0_22], %19 {strides = array<i32>} : memref<36x288xbf16, #tpu.memory_space<vmem>>, vector<4x288xbf16>,
    %c0_23 = arith.constant 0 : index
    %c0_24 = arith.constant 0 : index
    %c37 = arith.constant 37 : index
    %21 = vector.load %arg1[%c0_23, %c0_24, %c37] : memref<1x4x326xbf16, #tpu.memory_space<vmem>>, vector<1x4x288xbf16>
    %22 = vector.shape_cast %21 : vector<1x4x288xbf16> to vector<4x288xbf16>
    %c28 = arith.constant 28 : index
    %c0_25 = arith.constant 0 : index
    %23 = vector.load %arg6[%c28, %c0_25] : memref<36x288xbf16, #tpu.memory_space<vmem>>, vector<4x288xbf16>
    tpu.vector_store %arg6[%c28, %c0_25], %22 {strides = array<i32>} : memref<36x288xbf16, #tpu.memory_space<vmem>>, vector<4x288xbf16>,
    %c0_26 = arith.constant 0 : index
    %c0_27 = arith.constant 0 : index
    %c38 = arith.constant 38 : index
    %24 = vector.load %arg1[%c0_26, %c0_27, %c38] : memref<1x4x326xbf16, #tpu.memory_space<vmem>>, vector<1x4x288xbf16>
    %25 = vector.shape_cast %24 : vector<1x4x288xbf16> to vector<4x288xbf16>
    %c32 = arith.constant 32 : index
    %c0_28 = arith.constant 0 : index
    %26 = vector.load %arg6[%c32, %c0_28] : memref<36x288xbf16, #tpu.memory_space<vmem>>, vector<4x288xbf16>
    tpu.vector_store %arg6[%c32, %c0_28], %25 {strides = array<i32>} : memref<36x288xbf16, #tpu.memory_space<vmem>>, vector<4x288xbf16>,
    %c0_29 = arith.constant 0 : index
    %c0_30 = arith.constant 0 : index
    %27 = vector.load %arg2[%c0_29, %c0_30] : memref<4x36xbf16, #tpu.memory_space<vmem>>, vector<4x36xbf16>
    %c0_31 = arith.constant 0 : index
    %c0_32 = arith.constant 0 : index
    %28 = vector.load %arg6[%c0_31, %c0_32] : memref<36x288xbf16, #tpu.memory_space<vmem>>, vector<36x288xbf16>
    %cst = arith.constant dense<0.000000e+00> : vector<4x288xf32>
    %29 = tpu.matmul %27, %28, %cst {dimension_numbers = #tpu.dot_dimension_numbers<[1], [0], [0], [1], [0, 0, 1, 1], [], []>} : vector<4x36xbf16>, vector<36x288xbf16>, vector<4x288xf32> -> vector<4x288xf32>
    %c0_33 = arith.constant 0 : index
    %c0_34 = arith.constant 0 : index
    %c0_35 = arith.constant 0 : index
    %30 = vector.load %arg4[%c0_33, %c0_34, %c0_35] : memref<1x4x288xf32, #tpu.memory_space<vmem>>, vector<1x4x288xf32>
    %31 = vector.shape_cast %30 : vector<1x4x288xf32> to vector<4x288xf32>
    %32 = vector.shape_cast %29 : vector<4x288xf32> to vector<1x4x288xf32>
    tpu.vector_store %arg4[%c0_33, %c0_34, %c0_35], %32 {strides = array<i32>} : memref<1x4x288xf32, #tpu.memory_space<vmem>>, vector<1x4x288xf32>,
    %c0_36 = arith.constant 0 : index
    %c0_37 = arith.constant 0 : index
    %33 = vector.load %arg3[%c0_36, %c0_37] : memref<1x288xf32, #tpu.memory_space<vmem>>, vector<1x288xf32>
    %34 = vector.broadcast %33 : vector<1x288xf32> to vector<4x288xf32>
    %35 = arith.mulf %29, %34 : vector<4x288xf32>
    %cst_38 = arith.constant dense<0.000000e+00> : vector<4xf32>
    %36 = vector.multi_reduction <add>, %35, %cst_38 [1] : vector<4x288xf32> to vector<4xf32>
    %37 = vector.shape_cast %36 : vector<4xf32> to vector<4x1xf32>
    %38 = arith.mulf %35, %29 : vector<4x288xf32>
    %cst_39 = arith.constant dense<0.000000e+00> : vector<4xf32>
    %39 = vector.multi_reduction <add>, %38, %cst_39 [1] : vector<4x288xf32> to vector<4xf32>
    %40 = vector.shape_cast %39 : vector<4xf32> to vector<4x1xf32>
    %41 = tpu.concatenate %37, %40 in 1 : vector<4x1xf32>, vector<4x1xf32> -> vector<4x2xf32>
    %c0_40 = arith.constant 0 : index
    %c0_41 = arith.constant 0 : index
    %c0_42 = arith.constant 0 : index
    %42 = vector.load %arg5[%c0_40, %c0_41, %c0_42] : memref<1x4x2xf32, #tpu.memory_space<vmem>>, vector<1x4x2xf32>
    %43 = vector.shape_cast %42 : vector<1x4x2xf32> to vector<4x2xf32>
    %44 = vector.shape_cast %41 : vector<4x2xf32> to vector<1x4x2xf32>
    tpu.vector_store %arg5[%c0_40, %c0_41, %c0_42], %44 {strides = array<i32>} : memref<1x4x2xf32, #tpu.memory_space<vmem>>, vector<1x4x2xf32>,
    return
  }
  func.func @transform_0(%arg0: i32) -> (i32, i32, i32) {
    %c0_i32 = arith.constant 0 : i32
    %c0_i32_0 = arith.constant 0 : i32
    %c0_i32_1 = arith.constant 0 : i32
    return %arg0, %c0_i32, %c0_i32_0 : i32, i32, i32
  }
  func.func @transform_1(%arg0: i32) -> (i32, i32) {
    %c0_i32 = arith.constant 0 : i32
    %c0_i32_0 = arith.constant 0 : i32
    %c0_i32_1 = arith.constant 0 : i32
    return %c0_i32, %c0_i32_0 : i32, i32
  }
  func.func @transform_2(%arg0: i32) -> (i32, i32) {
    %c0_i32 = arith.constant 0 : i32
    %c0_i32_0 = arith.constant 0 : i32
    %c0_i32_1 = arith.constant 0 : i32
    return %c0_i32, %c0_i32_0 : i32, i32
  }
  func.func @transform_3(%arg0: i32) -> (i32, i32, i32) {
    %c0_i32 = arith.constant 0 : i32
    %c0_i32_0 = arith.constant 0 : i32
    %c0_i32_1 = arith.constant 0 : i32
    return %arg0, %c0_i32, %c0_i32_0 : i32, i32, i32
  }
  func.func @transform_4(%arg0: i32) -> (i32, i32, i32) {
    %c0_i32 = arith.constant 0 : i32
    %c0_i32_0 = arith.constant 0 : i32
    %c0_i32_1 = arith.constant 0 : i32
    return %arg0, %c0_i32, %c0_i32_0 : i32, i32, i32
  }
}

module attributes {stable_mosaic.version = 11 : i64} {
  func.func @kernel(%arg0: i32, %arg1: memref<1x4x288xf32, #tpu.memory_space<vmem>>, %arg2: memref<4x2xf32, #tpu.memory_space<vmem>>, %arg3: memref<4x1xf32, #tpu.memory_space<vmem>>, %arg4: memref<4x1xf32, #tpu.memory_space<vmem>>, %arg5: memref<1x288xf32, #tpu.memory_space<vmem>>, %arg6: memref<4x36xbf16, #tpu.memory_space<vmem>>, %arg7: memref<1x4x288xf32, #tpu.memory_space<vmem>>, %arg8: memref<1x4x2xf32, #tpu.memory_space<vmem>>, %arg9: memref<4x326xbf16, #tpu.memory_space<vmem>>, %arg10: memref<36x288xbf16, #tpu.memory_space<vmem>>) attributes {dimension_semantics = [#tpu.dimension_semantics<parallel>], iteration_bounds = array<i64: 2>, scalar_prefetch = 0 : i64, scratch_operands = 2 : i64, tpu.core_type = #tpu.core_type<tc>, window_params = [{transform_indices = @transform_0, window_bounds = array<i64: 1, 4, 288>}, {pipeline_mode = #tpu.pipeline_mode<synchronous>, transform_indices = @transform_1, window_bounds = array<i64: 4, 2>}, {pipeline_mode = #tpu.pipeline_mode<synchronous>, transform_indices = @transform_2, window_bounds = array<i64: 4, 1>}, {pipeline_mode = #tpu.pipeline_mode<synchronous>, transform_indices = @transform_3, window_bounds = array<i64: 4, 1>}, {pipeline_mode = #tpu.pipeline_mode<synchronous>, transform_indices = @transform_4, window_bounds = array<i64: 1, 288>}, {pipeline_mode = #tpu.pipeline_mode<synchronous>, transform_indices = @transform_5, window_bounds = array<i64: 4, 36>}, {transform_indices = @transform_6, window_bounds = array<i64: 1, 4, 288>}, {transform_indices = @transform_7, window_bounds = array<i64: 1, 4, 2>}]} {
    %c0 = arith.constant 0 : index
    %c0_0 = arith.constant 0 : index
    %0 = vector.load %arg2[%c0, %c0_0] : memref<4x2xf32, #tpu.memory_space<vmem>>, vector<4x2xf32>
    %1 = vector.extract_strided_slice %0 {offsets = [0, 0], sizes = [4, 1], strides = [1, 1]} : vector<4x2xf32> to vector<4x1xf32>
    %cst = arith.constant 0.001953125 : f32
    %2 = vector.broadcast %cst : f32 to vector<4x1xf32>
    %3 = arith.mulf %1, %2 : vector<4x1xf32>
    %4 = vector.extract_strided_slice %0 {offsets = [0, 1], sizes = [4, 1], strides = [1, 1]} : vector<4x2xf32> to vector<4x1xf32>
    %cst_1 = arith.constant 0.001953125 : f32
    %5 = vector.broadcast %cst_1 : f32 to vector<4x1xf32>
    %6 = arith.mulf %4, %5 : vector<4x1xf32>
    %7 = arith.mulf %3, %3 : vector<4x1xf32>
    %8 = arith.subf %6, %7 : vector<4x1xf32>
    %c0_2 = arith.constant 0 : index
    %c0_3 = arith.constant 0 : index
    %9 = vector.load %arg3[%c0_2, %c0_3] : memref<4x1xf32, #tpu.memory_space<vmem>>, vector<4x1xf32>
    %cst_4 = arith.constant 9.99999974E-6 : f32
    %10 = vector.broadcast %cst_4 : f32 to vector<4x1xf32>
    %11 = arith.addf %8, %10 : vector<4x1xf32>
    %12 = math.rsqrt %11 : vector<4x1xf32>
    %13 = arith.mulf %9, %12 : vector<4x1xf32>
    %c0_5 = arith.constant 0 : index
    %c0_6 = arith.constant 0 : index
    %14 = vector.load %arg4[%c0_5, %c0_6] : memref<4x1xf32, #tpu.memory_space<vmem>>, vector<4x1xf32>
    %15 = arith.mulf %3, %13 : vector<4x1xf32>
    %16 = arith.subf %14, %15 : vector<4x1xf32>
    %c0_7 = arith.constant 0 : index
    %c0_8 = arith.constant 0 : index
    %17 = vector.load %arg5[%c0_7, %c0_8] : memref<1x288xf32, #tpu.memory_space<vmem>>, vector<1x288xf32>
    %c0_9 = arith.constant 0 : index
    %c0_10 = arith.constant 0 : index
    %c0_11 = arith.constant 0 : index
    %18 = vector.load %arg1[%c0_9, %c0_10, %c0_11] : memref<1x4x288xf32, #tpu.memory_space<vmem>>, vector<1x4x288xf32>
    %19 = vector.shape_cast %18 : vector<1x4x288xf32> to vector<4x288xf32>
    %20 = vector.broadcast %13 : vector<4x1xf32> to vector<4x288xf32>
    %21 = arith.mulf %19, %20 : vector<4x288xf32>
    %22 = vector.broadcast %16 : vector<4x1xf32> to vector<4x288xf32>
    %23 = arith.addf %21, %22 : vector<4x288xf32>
    %cst_12 = arith.constant 0.000000e+00 : f32
    %24 = vector.broadcast %cst_12 : f32 to vector<4x288xf32>
    %25 = arith.maximumf %23, %24 : vector<4x288xf32>
    %26 = vector.broadcast %17 : vector<1x288xf32> to vector<4x288xf32>
    %27 = arith.mulf %25, %26 : vector<4x288xf32>
    %cst_13 = arith.constant 0.000000e+00 : bf16
    %28 = vector.broadcast %cst_13 : bf16 to vector<4x326xbf16>
    %c0_14 = arith.constant 0 : index
    %c0_15 = arith.constant 0 : index
    %29 = vector.load %arg9[%c0_14, %c0_15] : memref<4x326xbf16, #tpu.memory_space<vmem>>, vector<4x326xbf16>
    tpu.vector_store %arg9[%c0_14, %c0_15], %28 {strides = array<i32>} : memref<4x326xbf16, #tpu.memory_space<vmem>>, vector<4x326xbf16>,
    %30 = arith.truncf %27 : vector<4x288xf32> to vector<4x288xbf16>
    %c0_16 = arith.constant 0 : index
    %c19 = arith.constant 19 : index
    %31 = vector.load %arg9[%c0_16, %c19] : memref<4x326xbf16, #tpu.memory_space<vmem>>, vector<4x288xbf16>
    tpu.vector_store %arg9[%c0_16, %c19], %30 {strides = array<i32>} : memref<4x326xbf16, #tpu.memory_space<vmem>>, vector<4x288xbf16>,
    %c0_17 = arith.constant 0 : index
    %c0_18 = arith.constant 0 : index
    %32 = vector.load %arg9[%c0_17, %c0_18] : memref<4x326xbf16, #tpu.memory_space<vmem>>, vector<4x288xbf16>
    %c0_19 = arith.constant 0 : index
    %c0_20 = arith.constant 0 : index
    %33 = vector.load %arg10[%c0_19, %c0_20] : memref<36x288xbf16, #tpu.memory_space<vmem>>, vector<4x288xbf16>
    tpu.vector_store %arg10[%c0_19, %c0_20], %32 {strides = array<i32>} : memref<36x288xbf16, #tpu.memory_space<vmem>>, vector<4x288xbf16>,
    %c0_21 = arith.constant 0 : index
    %c1 = arith.constant 1 : index
    %34 = vector.load %arg9[%c0_21, %c1] : memref<4x326xbf16, #tpu.memory_space<vmem>>, vector<4x288xbf16>
    %c4 = arith.constant 4 : index
    %c0_22 = arith.constant 0 : index
    %35 = vector.load %arg10[%c4, %c0_22] : memref<36x288xbf16, #tpu.memory_space<vmem>>, vector<4x288xbf16>
    tpu.vector_store %arg10[%c4, %c0_22], %34 {strides = array<i32>} : memref<36x288xbf16, #tpu.memory_space<vmem>>, vector<4x288xbf16>,
    %c0_23 = arith.constant 0 : index
    %c2 = arith.constant 2 : index
    %36 = vector.load %arg9[%c0_23, %c2] : memref<4x326xbf16, #tpu.memory_space<vmem>>, vector<4x288xbf16>
    %c8 = arith.constant 8 : index
    %c0_24 = arith.constant 0 : index
    %37 = vector.load %arg10[%c8, %c0_24] : memref<36x288xbf16, #tpu.memory_space<vmem>>, vector<4x288xbf16>
    tpu.vector_store %arg10[%c8, %c0_24], %36 {strides = array<i32>} : memref<36x288xbf16, #tpu.memory_space<vmem>>, vector<4x288xbf16>,
    %c0_25 = arith.constant 0 : index
    %c18 = arith.constant 18 : index
    %38 = vector.load %arg9[%c0_25, %c18] : memref<4x326xbf16, #tpu.memory_space<vmem>>, vector<4x288xbf16>
    %c12 = arith.constant 12 : index
    %c0_26 = arith.constant 0 : index
    %39 = vector.load %arg10[%c12, %c0_26] : memref<36x288xbf16, #tpu.memory_space<vmem>>, vector<4x288xbf16>
    tpu.vector_store %arg10[%c12, %c0_26], %38 {strides = array<i32>} : memref<36x288xbf16, #tpu.memory_space<vmem>>, vector<4x288xbf16>,
    %c0_27 = arith.constant 0 : index
    %c19_28 = arith.constant 19 : index
    %40 = vector.load %arg9[%c0_27, %c19_28] : memref<4x326xbf16, #tpu.memory_space<vmem>>, vector<4x288xbf16>
    %c16 = arith.constant 16 : index
    %c0_29 = arith.constant 0 : index
    %41 = vector.load %arg10[%c16, %c0_29] : memref<36x288xbf16, #tpu.memory_space<vmem>>, vector<4x288xbf16>
    tpu.vector_store %arg10[%c16, %c0_29], %40 {strides = array<i32>} : memref<36x288xbf16, #tpu.memory_space<vmem>>, vector<4x288xbf16>,
    %c0_30 = arith.constant 0 : index
    %c20 = arith.constant 20 : index
    %42 = vector.load %arg9[%c0_30, %c20] : memref<4x326xbf16, #tpu.memory_space<vmem>>, vector<4x288xbf16>
    %c20_31 = arith.constant 20 : index
    %c0_32 = arith.constant 0 : index
    %43 = vector.load %arg10[%c20_31, %c0_32] : memref<36x288xbf16, #tpu.memory_space<vmem>>, vector<4x288xbf16>
    tpu.vector_store %arg10[%c20_31, %c0_32], %42 {strides = array<i32>} : memref<36x288xbf16, #tpu.memory_space<vmem>>, vector<4x288xbf16>,
    %c0_33 = arith.constant 0 : index
    %c36 = arith.constant 36 : index
    %44 = vector.load %arg9[%c0_33, %c36] : memref<4x326xbf16, #tpu.memory_space<vmem>>, vector<4x288xbf16>
    %c24 = arith.constant 24 : index
    %c0_34 = arith.constant 0 : index
    %45 = vector.load %arg10[%c24, %c0_34] : memref<36x288xbf16, #tpu.memory_space<vmem>>, vector<4x288xbf16>
    tpu.vector_store %arg10[%c24, %c0_34], %44 {strides = array<i32>} : memref<36x288xbf16, #tpu.memory_space<vmem>>, vector<4x288xbf16>,
    %c0_35 = arith.constant 0 : index
    %c37 = arith.constant 37 : index
    %46 = vector.load %arg9[%c0_35, %c37] : memref<4x326xbf16, #tpu.memory_space<vmem>>, vector<4x288xbf16>
    %c28 = arith.constant 28 : index
    %c0_36 = arith.constant 0 : index
    %47 = vector.load %arg10[%c28, %c0_36] : memref<36x288xbf16, #tpu.memory_space<vmem>>, vector<4x288xbf16>
    tpu.vector_store %arg10[%c28, %c0_36], %46 {strides = array<i32>} : memref<36x288xbf16, #tpu.memory_space<vmem>>, vector<4x288xbf16>,
    %c0_37 = arith.constant 0 : index
    %c38 = arith.constant 38 : index
    %48 = vector.load %arg9[%c0_37, %c38] : memref<4x326xbf16, #tpu.memory_space<vmem>>, vector<4x288xbf16>
    %c32 = arith.constant 32 : index
    %c0_38 = arith.constant 0 : index
    %49 = vector.load %arg10[%c32, %c0_38] : memref<36x288xbf16, #tpu.memory_space<vmem>>, vector<4x288xbf16>
    tpu.vector_store %arg10[%c32, %c0_38], %48 {strides = array<i32>} : memref<36x288xbf16, #tpu.memory_space<vmem>>, vector<4x288xbf16>,
    %c0_39 = arith.constant 0 : index
    %c0_40 = arith.constant 0 : index
    %50 = vector.load %arg6[%c0_39, %c0_40] : memref<4x36xbf16, #tpu.memory_space<vmem>>, vector<4x36xbf16>
    %c0_41 = arith.constant 0 : index
    %c0_42 = arith.constant 0 : index
    %51 = vector.load %arg10[%c0_41, %c0_42] : memref<36x288xbf16, #tpu.memory_space<vmem>>, vector<36x288xbf16>
    %cst_43 = arith.constant dense<0.000000e+00> : vector<4x288xf32>
    %52 = tpu.matmul %50, %51, %cst_43 {dimension_numbers = #tpu.dot_dimension_numbers<[1], [0], [0], [1], [0, 0, 1, 1], [], []>} : vector<4x36xbf16>, vector<36x288xbf16>, vector<4x288xf32> -> vector<4x288xf32>
    %c0_44 = arith.constant 0 : index
    %c0_45 = arith.constant 0 : index
    %c0_46 = arith.constant 0 : index
    %53 = vector.load %arg7[%c0_44, %c0_45, %c0_46] : memref<1x4x288xf32, #tpu.memory_space<vmem>>, vector<1x4x288xf32>
    %54 = vector.shape_cast %53 : vector<1x4x288xf32> to vector<4x288xf32>
    %55 = vector.shape_cast %52 : vector<4x288xf32> to vector<1x4x288xf32>
    tpu.vector_store %arg7[%c0_44, %c0_45, %c0_46], %55 {strides = array<i32>} : memref<1x4x288xf32, #tpu.memory_space<vmem>>, vector<1x4x288xf32>,
    %56 = vector.broadcast %17 : vector<1x288xf32> to vector<4x288xf32>
    %57 = arith.mulf %52, %56 : vector<4x288xf32>
    %cst_47 = arith.constant dense<0.000000e+00> : vector<4xf32>
    %58 = vector.multi_reduction <add>, %57, %cst_47 [1] : vector<4x288xf32> to vector<4xf32>
    %59 = vector.shape_cast %58 : vector<4xf32> to vector<4x1xf32>
    %60 = arith.mulf %57, %52 : vector<4x288xf32>
    %cst_48 = arith.constant dense<0.000000e+00> : vector<4xf32>
    %61 = vector.multi_reduction <add>, %60, %cst_48 [1] : vector<4x288xf32> to vector<4xf32>
    %62 = vector.shape_cast %61 : vector<4xf32> to vector<4x1xf32>
    %63 = tpu.concatenate %59, %62 in 1 : vector<4x1xf32>, vector<4x1xf32> -> vector<4x2xf32>
    %c0_49 = arith.constant 0 : index
    %c0_50 = arith.constant 0 : index
    %c0_51 = arith.constant 0 : index
    %64 = vector.load %arg8[%c0_49, %c0_50, %c0_51] : memref<1x4x2xf32, #tpu.memory_space<vmem>>, vector<1x4x2xf32>
    %65 = vector.shape_cast %64 : vector<1x4x2xf32> to vector<4x2xf32>
    %66 = vector.shape_cast %63 : vector<4x2xf32> to vector<1x4x2xf32>
    tpu.vector_store %arg8[%c0_49, %c0_50, %c0_51], %66 {strides = array<i32>} : memref<1x4x2xf32, #tpu.memory_space<vmem>>, vector<1x4x2xf32>,
    return
  }
  func.func @transform_0(%arg0: i32) -> (i32, i32, i32) {
    %c0_i32 = arith.constant 0 : i32
    %c0_i32_0 = arith.constant 0 : i32
    %c0_i32_1 = arith.constant 0 : i32
    return %arg0, %c0_i32, %c0_i32_0 : i32, i32, i32
  }
  func.func @transform_1(%arg0: i32) -> (i32, i32) {
    %c0_i32 = arith.constant 0 : i32
    %c0_i32_0 = arith.constant 0 : i32
    %c0_i32_1 = arith.constant 0 : i32
    return %c0_i32, %c0_i32_0 : i32, i32
  }
  func.func @transform_2(%arg0: i32) -> (i32, i32) {
    %c0_i32 = arith.constant 0 : i32
    %c0_i32_0 = arith.constant 0 : i32
    %c0_i32_1 = arith.constant 0 : i32
    return %c0_i32, %c0_i32_0 : i32, i32
  }
  func.func @transform_3(%arg0: i32) -> (i32, i32) {
    %c0_i32 = arith.constant 0 : i32
    %c0_i32_0 = arith.constant 0 : i32
    %c0_i32_1 = arith.constant 0 : i32
    return %c0_i32, %c0_i32_0 : i32, i32
  }
  func.func @transform_4(%arg0: i32) -> (i32, i32) {
    %c0_i32 = arith.constant 0 : i32
    %c0_i32_0 = arith.constant 0 : i32
    %c0_i32_1 = arith.constant 0 : i32
    return %c0_i32, %c0_i32_0 : i32, i32
  }
  func.func @transform_5(%arg0: i32) -> (i32, i32) {
    %c0_i32 = arith.constant 0 : i32
    %c0_i32_0 = arith.constant 0 : i32
    %c0_i32_1 = arith.constant 0 : i32
    return %c0_i32, %c0_i32_0 : i32, i32
  }
  func.func @transform_6(%arg0: i32) -> (i32, i32, i32) {
    %c0_i32 = arith.constant 0 : i32
    %c0_i32_0 = arith.constant 0 : i32
    %c0_i32_1 = arith.constant 0 : i32
    return %arg0, %c0_i32, %c0_i32_0 : i32, i32, i32
  }
  func.func @transform_7(%arg0: i32) -> (i32, i32, i32) {
    %c0_i32 = arith.constant 0 : i32
    %c0_i32_0 = arith.constant 0 : i32
    %c0_i32_1 = arith.constant 0 : i32
    return %arg0, %c0_i32, %c0_i32_0 : i32, i32, i32
  }
}

module attributes {stable_mosaic.version = 11 : i64} {
  func.func @kernel(%arg0: i32, %arg1: memref<1x4x288xf32, #tpu.memory_space<vmem>>, %arg2: memref<4x2xf32, #tpu.memory_space<vmem>>, %arg3: memref<4x1xf32, #tpu.memory_space<vmem>>, %arg4: memref<4x1xf32, #tpu.memory_space<vmem>>, %arg5: memref<1x4x288xf32, #tpu.memory_space<vmem>>, %arg6: memref<1x4x288xf32, #tpu.memory_space<vmem>>) attributes {dimension_semantics = [#tpu.dimension_semantics<parallel>], iteration_bounds = array<i64: 2>, scalar_prefetch = 0 : i64, scratch_operands = 0 : i64, tpu.core_type = #tpu.core_type<tc>, window_params = [{transform_indices = @transform_0, window_bounds = array<i64: 1, 4, 288>}, {pipeline_mode = #tpu.pipeline_mode<synchronous>, transform_indices = @transform_1, window_bounds = array<i64: 4, 2>}, {pipeline_mode = #tpu.pipeline_mode<synchronous>, transform_indices = @transform_2, window_bounds = array<i64: 4, 1>}, {pipeline_mode = #tpu.pipeline_mode<synchronous>, transform_indices = @transform_3, window_bounds = array<i64: 4, 1>}, {transform_indices = @transform_4, window_bounds = array<i64: 1, 4, 288>}, {transform_indices = @transform_5, window_bounds = array<i64: 1, 4, 288>}]} {
    %c0 = arith.constant 0 : index
    %c0_0 = arith.constant 0 : index
    %0 = vector.load %arg2[%c0, %c0_0] : memref<4x2xf32, #tpu.memory_space<vmem>>, vector<4x2xf32>
    %1 = vector.extract_strided_slice %0 {offsets = [0, 0], sizes = [4, 1], strides = [1, 1]} : vector<4x2xf32> to vector<4x1xf32>
    %cst = arith.constant 0.001953125 : f32
    %2 = vector.broadcast %cst : f32 to vector<4x1xf32>
    %3 = arith.mulf %1, %2 : vector<4x1xf32>
    %4 = vector.extract_strided_slice %0 {offsets = [0, 1], sizes = [4, 1], strides = [1, 1]} : vector<4x2xf32> to vector<4x1xf32>
    %cst_1 = arith.constant 0.001953125 : f32
    %5 = vector.broadcast %cst_1 : f32 to vector<4x1xf32>
    %6 = arith.mulf %4, %5 : vector<4x1xf32>
    %7 = arith.mulf %3, %3 : vector<4x1xf32>
    %8 = arith.subf %6, %7 : vector<4x1xf32>
    %c0_2 = arith.constant 0 : index
    %c0_3 = arith.constant 0 : index
    %9 = vector.load %arg3[%c0_2, %c0_3] : memref<4x1xf32, #tpu.memory_space<vmem>>, vector<4x1xf32>
    %cst_4 = arith.constant 9.99999974E-6 : f32
    %10 = vector.broadcast %cst_4 : f32 to vector<4x1xf32>
    %11 = arith.addf %8, %10 : vector<4x1xf32>
    %12 = math.rsqrt %11 : vector<4x1xf32>
    %13 = arith.mulf %9, %12 : vector<4x1xf32>
    %c0_5 = arith.constant 0 : index
    %c0_6 = arith.constant 0 : index
    %14 = vector.load %arg4[%c0_5, %c0_6] : memref<4x1xf32, #tpu.memory_space<vmem>>, vector<4x1xf32>
    %15 = arith.mulf %3, %13 : vector<4x1xf32>
    %16 = arith.subf %14, %15 : vector<4x1xf32>
    %c0_7 = arith.constant 0 : index
    %c0_8 = arith.constant 0 : index
    %c0_9 = arith.constant 0 : index
    %17 = vector.load %arg1[%c0_7, %c0_8, %c0_9] : memref<1x4x288xf32, #tpu.memory_space<vmem>>, vector<1x4x288xf32>
    %18 = vector.shape_cast %17 : vector<1x4x288xf32> to vector<4x288xf32>
    %19 = vector.broadcast %13 : vector<4x1xf32> to vector<4x288xf32>
    %20 = arith.mulf %18, %19 : vector<4x288xf32>
    %21 = vector.broadcast %16 : vector<4x1xf32> to vector<4x288xf32>
    %22 = arith.addf %20, %21 : vector<4x288xf32>
    %c0_10 = arith.constant 0 : index
    %c0_11 = arith.constant 0 : index
    %c0_12 = arith.constant 0 : index
    %23 = vector.load %arg5[%c0_10, %c0_11, %c0_12] : memref<1x4x288xf32, #tpu.memory_space<vmem>>, vector<1x4x288xf32>
    %24 = vector.shape_cast %23 : vector<1x4x288xf32> to vector<4x288xf32>
    %25 = arith.addf %22, %24 : vector<4x288xf32>
    %cst_13 = arith.constant 0.000000e+00 : f32
    %26 = vector.broadcast %cst_13 : f32 to vector<4x288xf32>
    %27 = arith.maximumf %25, %26 : vector<4x288xf32>
    %c0_14 = arith.constant 0 : index
    %c0_15 = arith.constant 0 : index
    %c0_16 = arith.constant 0 : index
    %28 = vector.load %arg6[%c0_14, %c0_15, %c0_16] : memref<1x4x288xf32, #tpu.memory_space<vmem>>, vector<1x4x288xf32>
    %29 = vector.shape_cast %28 : vector<1x4x288xf32> to vector<4x288xf32>
    %30 = vector.shape_cast %27 : vector<4x288xf32> to vector<1x4x288xf32>
    tpu.vector_store %arg6[%c0_14, %c0_15, %c0_16], %30 {strides = array<i32>} : memref<1x4x288xf32, #tpu.memory_space<vmem>>, vector<1x4x288xf32>,
    return
  }
  func.func @transform_0(%arg0: i32) -> (i32, i32, i32) {
    %c0_i32 = arith.constant 0 : i32
    %c0_i32_0 = arith.constant 0 : i32
    %c0_i32_1 = arith.constant 0 : i32
    return %arg0, %c0_i32, %c0_i32_0 : i32, i32, i32
  }
  func.func @transform_1(%arg0: i32) -> (i32, i32) {
    %c0_i32 = arith.constant 0 : i32
    %c0_i32_0 = arith.constant 0 : i32
    %c0_i32_1 = arith.constant 0 : i32
    return %c0_i32, %c0_i32_0 : i32, i32
  }
  func.func @transform_2(%arg0: i32) -> (i32, i32) {
    %c0_i32 = arith.constant 0 : i32
    %c0_i32_0 = arith.constant 0 : i32
    %c0_i32_1 = arith.constant 0 : i32
    return %c0_i32, %c0_i32_0 : i32, i32
  }
  func.func @transform_3(%arg0: i32) -> (i32, i32) {
    %c0_i32 = arith.constant 0 : i32
    %c0_i32_0 = arith.constant 0 : i32
    %c0_i32_1 = arith.constant 0 : i32
    return %c0_i32, %c0_i32_0 : i32, i32
  }
  func.func @transform_4(%arg0: i32) -> (i32, i32, i32) {
    %c0_i32 = arith.constant 0 : i32
    %c0_i32_0 = arith.constant 0 : i32
    %c0_i32_1 = arith.constant 0 : i32
    return %arg0, %c0_i32, %c0_i32_0 : i32, i32, i32
  }
  func.func @transform_5(%arg0: i32) -> (i32, i32, i32) {
    %c0_i32 = arith.constant 0 : i32
    %c0_i32_0 = arith.constant 0 : i32
    %c0_i32_1 = arith.constant 0 : i32
    return %arg0, %c0_i32, %c0_i32_0 : i32, i32, i32
  }
}

</mosaic_0001>

<llo_original>
// kernel: _basic_block_impl.5
$region0: #{_basic_block_impl.5}
  #allocation0 [shape = 'u32[]', space=smem, size = 0x4, offset = 0x4, fixed_abs, tag = 'smem constant byte address 0x4 - core index']
  #allocation1 [shape = 'u32[72,128]{1,0:T(1,128)}', space=vmem, size = 0x9000, scoped, tag = 'internal scratch']
  %s0 = inlined_call_operand.vmem [shape: f32[2,4,288], index: 0, kind: input, shape index: {}]
  %s1 = inlined_call_operand.vmem [shape: f32[4,2], index: 1, kind: input, shape index: {}]
  %s2 = inlined_call_operand.vmem [shape: f32[4,1], index: 2, kind: input, shape index: {}]
  %s3 = inlined_call_operand.vmem [shape: f32[4,1], index: 3, kind: input, shape index: {}]
  %s4 = inlined_call_operand.vmem [shape: f32[2,4,288], index: 4, kind: input, shape index: {}]
  %s5 = inlined_call_operand.vmem [shape: f32[2,4,288], index: 5, kind: output, shape index: {}]
  %s6 = sld [smem:[#allocation0]]
  $region53: #{_basic_block_impl.5} parent=0
    _
  %s8 = ssub.s32 1, %s6
  %s9 = scalar_select 0, %s8, %s6
  loop: start=0, step=1, limit=4
  $region2: #{_basic_block_impl.5} parent=0 // loop_pre_header
    _
  $region3: #{_basic_block_impl.5} parent=0 // loop_header
    %s11 = sphi 0, %s15
    %p12 = scmp.ge.s32.totalorder %s11, 4
    %s21 = sphi 0, %s23
    %s24 = sphi 0, %s21
    %s25 = sphi 0, %s24
    %s41 = sphi 0, %s25
    %s45 = sphi 0, %s45
    %s47 = sphi 0, %s45
    %s48 = sphi 0, %s47
    %s62 = sphi 0, %s48
    %s66 = sphi 0, %s66
    %s68 = sphi 0, %s66
    %s69 = sphi 0, %s68
    %s83 = sphi 0, %s69
    %s87 = sphi 0, %s87
    %s89 = sphi 0, %s87
    %s90 = sphi 0, %s89
    %s104 = sphi 0, %s90
    %s110 = sphi 0, %s112
    %s113 = sphi 0, %s110
    %s114 = sphi 0, %s113
    %s130 = sphi 0, %s114
    %s136 = sphi 0, %s138
    %s139 = sphi 0, %s136
    %s140 = sphi 0, %s139
    %s156 = sphi 0, %s140
  $region4: #{_basic_block_impl.5} parent=0 // loop_header_branch
    %14 = sbr.rel (%p12) target = $region8
  $region5: #{_basic_block_impl.5} parent=0 // loop_body
    %s16 = ssub.s32 %s11, 1
    %s17 = ssub.s32 %s11, 2
    %s18 = sadd.s32 %s11, 1
    %s19 = ssub.s32 %s11, %s18
    %p20 = scmp.eq.s32.totalorder %s19, 0
    %s22 = sadd.s32 %s21, 1
    %s23 = scalar_select %p20, %s21, %s22
    %p26 = pneg %p20
    %p27 = scmp.eq.s32.totalorder %s11, 1
    %p28 = por %p26, %p27
    %p29 = scmp.ne.s32.totalorder %s21, %s24
    %p30 = scmp.eq.s32.totalorder %s11, 0
    %p31 = por %p29, %p30
    %p32 = scmp.ne.s32.totalorder %s21, %s24
    %p33 = scmp.eq.s32.totalorder %s16, 1
    %p34 = por %p32, %p33
    %p35 = scmp.ne.s32.totalorder %s24, %s25
    %p36 = scmp.eq.s32.totalorder %s16, 0
    %p37 = por %p35, %p36
    %p38 = scmp.ne.s32.totalorder %s24, %s25
    %p39 = scmp.eq.s32.totalorder %s17, 1
    %p40 = por %p38, %p39
    %p42 = scmp.ne.s32.totalorder %s25, %s41
    %p43 = scmp.eq.s32.totalorder %s17, 0
    %p44 = por %p42, %p43
    %s46 = sadd.s32 %s45, 1
    %p49 = scmp.eq.s32.totalorder %s11, 1
    %p50 = scmp.ne.s32.totalorder %s45, %s47
    %p51 = scmp.eq.s32.totalorder %s11, 0
    %p52 = por %p50, %p51
    %p53 = scmp.ne.s32.totalorder %s45, %s47
    %p54 = scmp.eq.s32.totalorder %s16, 1
    %p55 = por %p53, %p54
    %p56 = scmp.ne.s32.totalorder %s47, %s48
    %p57 = scmp.eq.s32.totalorder %s16, 0
    %p58 = por %p56, %p57
    %p59 = scmp.ne.s32.totalorder %s47, %s48
    %p60 = scmp.eq.s32.totalorder %s17, 1
    %p61 = por %p59, %p60
    %p63 = scmp.ne.s32.totalorder %s48, %s62
    %p64 = scmp.eq.s32.totalorder %s17, 0
    %p65 = por %p63, %p64
    %s67 = sadd.s32 %s66, 1
    %p70 = scmp.eq.s32.totalorder %s11, 1
    %p71 = scmp.ne.s32.totalorder %s66, %s68
    %p72 = scmp.eq.s32.totalorder %s11, 0
    %p73 = por %p71, %p72
    %p74 = scmp.ne.s32.totalorder %s66, %s68
    %p75 = scmp.eq.s32.totalorder %s16, 1
    %p76 = por %p74, %p75
    %p77 = scmp.ne.s32.totalorder %s68, %s69
    %p78 = scmp.eq.s32.totalorder %s16, 0
    %p79 = por %p77, %p78
    %p80 = scmp.ne.s32.totalorder %s68, %s69
    %p81 = scmp.eq.s32.totalorder %s17, 1
    %p82 = por %p80, %p81
    %p84 = scmp.ne.s32.totalorder %s69, %s83
    %p85 = scmp.eq.s32.totalorder %s17, 0
    %p86 = por %p84, %p85
    %s88 = sadd.s32 %s87, 1
    %p91 = scmp.eq.s32.totalorder %s11, 1
    %p92 = scmp.ne.s32.totalorder %s87, %s89
    %p93 = scmp.eq.s32.totalorder %s11, 0
    %p94 = por %p92, %p93
    %p95 = scmp.ne.s32.totalorder %s87, %s89
    %p96 = scmp.eq.s32.totalorder %s16, 1
    %p97 = por %p95, %p96
    %p98 = scmp.ne.s32.totalorder %s89, %s90
    %p99 = scmp.eq.s32.totalorder %s16, 0
    %p100 = por %p98, %p99
    %p101 = scmp.ne.s32.totalorder %s89, %s90
    %p102 = scmp.eq.s32.totalorder %s17, 1
    %p103 = por %p101, %p102
    %p105 = scmp.ne.s32.totalorder %s90, %s104
    %p106 = scmp.eq.s32.totalorder %s17, 0
    %p107 = por %p105, %p106
    %s108 = ssub.s32 %s11, %s18
    %p109 = scmp.eq.s32.totalorder %s108, 0
    %s111 = sadd.s32 %s110, 1
    %s112 = scalar_select %p109, %s110, %s111
    %p115 = pneg %p109
    %p116 = scmp.eq.s32.totalorder %s11, 1
    %p117 = por %p115, %p116
    %p118 = scmp.ne.s32.totalorder %s110, %s113
    %p119 = scmp.eq.s32.totalorder %s11, 0
    %p120 = por %p118, %p119
    %p121 = scmp.ne.s32.totalorder %s110, %s113
    %p122 = scmp.eq.s32.totalorder %s16, 1
    %p123 = por %p121, %p122
    %p124 = scmp.ne.s32.totalorder %s113, %s114
    %p125 = scmp.eq.s32.totalorder %s16, 0
    %p126 = por %p124, %p125
    %p127 = scmp.ne.s32.totalorder %s113, %s114
    %p128 = scmp.eq.s32.totalorder %s17, 1
    %p129 = por %p127, %p128
    %p131 = scmp.ne.s32.totalorder %s114, %s130
    %p132 = scmp.eq.s32.totalorder %s17, 0
    %p133 = por %p131, %p132
    %s134 = ssub.s32 %s11, %s18
    %p135 = scmp.eq.s32.totalorder %s134, 0
    %s137 = sadd.s32 %s136, 1
    %s138 = scalar_select %p135, %s136, %s137
    %p141 = pneg %p135
    %p142 = scmp.eq.s32.totalorder %s11, 1
    %p143 = por %p141, %p142
    %p144 = scmp.ne.s32.totalorder %s136, %s139
    %p145 = scmp.eq.s32.totalorder %s11, 0
    %p146 = por %p144, %p145
    %p147 = scmp.ne.s32.totalorder %s136, %s139
    %p148 = scmp.eq.s32.totalorder %s16, 1
    %p149 = por %p147, %p148
    %p150 = scmp.ne.s32.totalorder %s139, %s140
    %p151 = scmp.eq.s32.totalorder %s16, 0
    %p152 = por %p150, %p151
    %p153 = scmp.ne.s32.totalorder %s139, %s140
    %p154 = scmp.eq.s32.totalorder %s17, 1
    %p155 = por %p153, %p154
    %p157 = scmp.ne.s32.totalorder %s140, %s156
    %p158 = scmp.eq.s32.totalorder %s17, 0
    %p159 = por %p157, %p158
    %p160 = scmp.le.s32.totalorder 1, %s11
    %p161 = scmp.lt.s32.totalorder %s11, 3
    %p162 = pnand %p160, %p161
    %p163 = pneg %p162
    // Predicated region
    $region9: #{_basic_block_impl.5} parent=5 // pred_check
      _
    $region10: #{_basic_block_impl.5} parent=5 // pred_check_branch
      %165 = sbr.rel (%p162) target = $region12
    $region11: #{_basic_block_impl.5} parent=5 // pred_region
      %s166 = ssub.s32 %s11, 1
      // Predicated region
      $region13: #{_basic_block_impl.5} parent=11 // pred_check
        %p167 = pneg %p58
      $region14: #{_basic_block_impl.5} parent=11 // pred_check_branch
        %169 = sbr.rel (%p167) target = $region16
      $region15: #{_basic_block_impl.5} parent=11 // pred_region
        _
      $region16: #{_basic_block_impl.5} parent=11 // pred_fallthru
        _
      // Predicated region
      $region17: #{_basic_block_impl.5} parent=11 // pred_check
        %p170 = pneg %p79
      $region18: #{_basic_block_impl.5} parent=11 // pred_check_branch
        %172 = sbr.rel (%p170) target = $region20
      $region19: #{_basic_block_impl.5} parent=11 // pred_region
        _
      $region20: #{_basic_block_impl.5} parent=11 // pred_fallthru
        _
      // Predicated region
      $region21: #{_basic_block_impl.5} parent=11 // pred_check
        %p173 = pneg %p100
      $region22: #{_basic_block_impl.5} parent=11 // pred_check_branch
        %175 = sbr.rel (%p173) target = $region24
      $region23: #{_basic_block_impl.5} parent=11 // pred_region
        _
      $region24: #{_basic_block_impl.5} parent=11 // pred_fallthru
        _
    $region12: #{_basic_block_impl.5} parent=5 // pred_fallthru
      _
    %p176 = scmp.lt.s32.totalorder %s11, 2
    // Predicated region
    $region25: #{_basic_block_impl.5} parent=5 // pred_check
      %p177 = pneg %p176
    $region26: #{_basic_block_impl.5} parent=5 // pred_check_branch
      %179 = sbr.rel (%p177) target = $region28
    $region27: #{_basic_block_impl.5} parent=5 // pred_region
      // Predicated region
      $region29: #{_basic_block_impl.5} parent=27 // pred_check
        %p180 = pneg %p31
      $region30: #{_basic_block_impl.5} parent=27 // pred_check_branch
        %182 = sbr.rel (%p180) target = $region32
      $region31: #{_basic_block_impl.5} parent=27 // pred_region
        %p183 = scmp.lt.s32.totalorder %s11, 1
        %s184 = scalar_select %p183, %s11, 1
        %s185 = smul.addr %s184, 3
        %s186 = smul.addr %s185, 4
        %s187 = scalar_lea.vmem %s0, %s186
      $region32: #{_basic_block_impl.5} parent=27 // pred_fallthru
        _
      // Predicated region
      $region33: #{_basic_block_impl.5} parent=27 // pred_check
        %p188 = pneg %p120
      $region34: #{_basic_block_impl.5} parent=27 // pred_check_branch
        %190 = sbr.rel (%p188) target = $region36
      $region35: #{_basic_block_impl.5} parent=27 // pred_region
        %p191 = scmp.lt.s32.totalorder %s11, 1
        %s192 = scalar_select %p191, %s11, 1
        %s193 = smul.addr %s192, 3
        %s194 = smul.addr %s193, 4
        %s195 = scalar_lea.vmem %s4, %s194
      $region36: #{_basic_block_impl.5} parent=27 // pred_fallthru
        _
    $region28: #{_basic_block_impl.5} parent=5 // pred_fallthru
      _
    %p196 = scmp.le.s32.totalorder 1, %s11
    %p197 = scmp.lt.s32.totalorder %s11, 3
    %p198 = pnand %p196, %p197
    %p199 = pneg %p198
    // Predicated region
    $region37: #{_basic_block_impl.5} parent=5 // pred_check
      _
    $region38: #{_basic_block_impl.5} parent=5 // pred_check_branch
      %201 = sbr.rel (%p198) target = $region40
    $region39: #{_basic_block_impl.5} parent=5 // pred_region
      %s202 = ssub.s32 %s11, 1
      %p203 = scmp.lt.s32.totalorder %s16, 1
      %s204 = scalar_select %p203, %s16, 1
      %s205 = smul.addr %s204, 3
      %s206 = smul.addr %s205, 4
      %s207 = scalar_lea.vmem %s0, %s206
      %p208 = pneg %p37
      %p209 = pneg %p34
      %p210 = pneg %p58
      %p211 = pneg %p55
      %p212 = pneg %p79
      %p213 = pneg %p76
      %p214 = pneg %p100
      %p215 = pneg %p97
      %p216 = scmp.lt.s32.totalorder %s16, 1
      %s217 = scalar_select %p216, %s16, 1
      %s218 = smul.addr %s217, 3
      %s219 = smul.addr %s218, 4
      %s220 = scalar_lea.vmem %s4, %s219
      %p221 = pneg %p126
      %p222 = pneg %p123
      %p223 = pneg %p152
      %p224 = pneg %p149
      %p225 = scmp.lt.s32.totalorder %s16, 1
      %s226 = scalar_select %p225, %s16, 1
      %s227 = smul.addr %s226, 3
      %s228 = smul.addr %s227, 4
      %s229 = scalar_lea.vmem %s5, %s228
      %p230 = scmp.lt.s32.totalorder %s16, 1
      %s231 = scalar_select %p230, %s16, 1
      %s232 = smul.addr %s231, 3
      %s233 = smul.addr %s232, 4
      %s234 = scalar_lea.vmem %s0, %s233
      %p235 = scmp.lt.s32.totalorder %s16, 1
      %s236 = scalar_select %p235, %s16, 1
      %s237 = smul.addr %s236, 3
      %s238 = smul.addr %s237, 4
      %s239 = scalar_lea.vmem %s4, %s238
      %p240 = scmp.lt.s32.totalorder %s16, 1
      %s241 = scalar_select %p240, %s16, 1
      %s242 = smul.addr %s241, 3
      %s243 = smul.addr %s242, 4
      %s244 = scalar_lea.vmem %s5, %s243
      %v245 = vld [vmem:[%s1] sm:$0xf]
      %v246 = vmul.f32 %v245, 0.001953125
      %v247 = vmul.f32 %v246, %v246
      %249 = vrot.lane.b32.xlu0 %v247, 1
      %v250 = vpop.permute.xlu0 %249
      %v252 = vsub.f32 %v246, %v250
      %v253 = vld [vmem:[%s2] sm:$0xf]
      %v254 = vadd.f32 %v252, 1e-05
      %v255 = vrsqrt.pop %v254
      %v256 = vmul.f32 %v255, %v254
      %v257 = vmul.f32 %v256, %v255
      %v258 = vmul.f32 0.5, %v257
      %v259 = vsub.f32 1.5, %v258
      %v260 = vmul.f32 %v255, %v259
      %vm261 = vweird.f32 %v254
      %vm262 = vweird.f32 %v255
      %vm263 = vmor %vm261, %vm262
      %v264 = vsel %vm263, %v255, %v260
      %266 = vrot.lane.b32.xlu0 %v264, 127
      %v267 = vpop.permute.xlu0 %266
      %v269 = vmul.f32 %v253, %v267
      %v270 = vld [vmem:[%s3] sm:$0xf]
      %v271 = vmul.f32 %v246, %v269
      %v272 = vsub.f32 %v270, %v271
      %v273 = vld [vmem:[%s234] sm:$0xff]
      %v274 = vld [vmem:[%s234 + $0x8] sm:$0xf]
      %276 = vset.pattern.permute.xlu0 0
      %277 = vperm.xlu0 %276, %v269
      %v278 = vpop.permute.xlu0 %277
      %v280 = vunpack.c.l.s4 839922192
      %v281 = vunpack.c.0.s8 %v280
      %v282 = vperm.slane %v278, %v281
      %v284 = vmul.f32 %v273, %v282
      %v285 = vmul.f32 %v274, %v282
      %287 = vset.pattern.permute.xlu0 0
      %288 = vperm.xlu0 %287, %v272
      %v289 = vpop.permute.xlu0 %288
      %v291 = vunpack.c.l.s4 839922192
      %v292 = vunpack.c.0.s8 %v291
      %v293 = vperm.slane %v289, %v292
      %v295 = vadd.f32 %v284, %v293
      %v296 = vadd.f32 %v285, %v293
      %v297 = vld [vmem:[%s239] sm:$0xff]
      %v298 = vld [vmem:[%s239 + $0x8] sm:$0xf]
      %v299 = vadd.f32 %v295, %v297
      %v300 = vadd.f32 %v296, %v298
      %v301 = vmax.f32 %v299, 0.0
      %v302 = vmax.f32 %v300, 0.0
      %303 = vst [vmem:[%s244] sm:$0xff] %v301
      %vm304 = vcmask 257024
      %305 = vst.msk [vmem:[%s244 + $0x8] sm:$0xf] %vm304, %v302
      %p306 = scmp.lt.s32.totalorder %s16, 1
      %s307 = scalar_select %p306, %s16, 1
      %s308 = smul.addr %s307, 3
      %s309 = smul.addr %s308, 4
      %s310 = scalar_lea.vmem %s5, %s309
      // Predicated region
      $region41: #{_basic_block_impl.5} parent=39 // pred_check
        %p311 = pneg %p149
      $region42: #{_basic_block_impl.5} parent=39 // pred_check_branch
        %313 = sbr.rel (%p311) target = $region44
      $region43: #{_basic_block_impl.5} parent=39 // pred_region
        _
      $region44: #{_basic_block_impl.5} parent=39 // pred_fallthru
        _
    $region40: #{_basic_block_impl.5} parent=5 // pred_fallthru
      _
    %p314 = scmp.le.s32.totalorder 2, %s11
    // Predicated region
    $region45: #{_basic_block_impl.5} parent=5 // pred_check
      %p315 = pneg %p314
    $region46: #{_basic_block_impl.5} parent=5 // pred_check_branch
      %317 = sbr.rel (%p315) target = $region48
    $region47: #{_basic_block_impl.5} parent=5 // pred_region
      %s318 = ssub.s32 %s11, 2
      // Predicated region
      $region49: #{_basic_block_impl.5} parent=47 // pred_check
        %p319 = pneg %p155
      $region50: #{_basic_block_impl.5} parent=47 // pred_check_branch
        %321 = sbr.rel (%p319) target = $region52
      $region51: #{_basic_block_impl.5} parent=47 // pred_region
        %p322 = scmp.lt.s32.totalorder %s17, 1
        %s323 = scalar_select %p322, %s17, 1
        %s324 = smul.addr %s323, 3
        %s325 = smul.addr %s324, 4
        %s326 = scalar_lea.vmem %s5, %s325
      $region52: #{_basic_block_impl.5} parent=47 // pred_fallthru
        _
    $region48: #{_basic_block_impl.5} parent=5 // pred_fallthru
      _
  $region6: #{_basic_block_impl.5} parent=0 // loop_footer
    %s15 = sadd.s32 1, %s11
  $region7: #{_basic_block_impl.5} parent=0 // loop_footer_branch
    %10 = sbr.rel target = $region3
  $region8: #{_basic_block_impl.5} parent=0 // loop_exit
    _

// kernel: _basic_block_impl.3
$region0: #{_basic_block_impl.3}
  #allocation0 [shape = 'u32[]', space=smem, size = 0x4, offset = 0x4, fixed_abs, tag = 'smem constant byte address 0x4 - core index']
  #allocation1 [shape = 'u32[72,128]{1,0:T(1,128)}', space=vmem, size = 0x9000, scoped, tag = 'internal scratch']
  #allocation2 [shape = 'bf16[36,288]{1,0:T(8,128)(2,1)}', space=vmem, size = 0x7800, scoped, tag = 'scratch operand']
  %s0 = inlined_call_operand.vmem [shape: bf16[2,4,326], index: 0, kind: input, shape index: {}]
  %s1 = inlined_call_operand.vmem [shape: bf16[4,36], index: 1, kind: input, shape index: {}]
  %s2 = inlined_call_operand.vmem [shape: f32[1,288], index: 2, kind: input, shape index: {}]
  %s3 = inlined_call_operand.vmem [shape: f32[2,4,288], index: 3, kind: output, shape index: {0}]
  %s4 = inlined_call_operand.vmem [shape: f32[2,4,2], index: 4, kind: output, shape index: {1}]
  %5 = xla_tuple %s3, %s4
  %s6 = sld [smem:[#allocation0]]
  $region53: #{_basic_block_impl.3} parent=0
    _
  %s8 = ssub.s32 1, %s6
  %s9 = scalar_select 0, %s8, %s6
  loop: start=0, step=1, limit=4
  $region2: #{_basic_block_impl.3} parent=0 // loop_pre_header
    _
  $region3: #{_basic_block_impl.3} parent=0 // loop_header
    %s11 = sphi 0, %s15
    %p12 = scmp.ge.s32.totalorder %s11, 4
    %s21 = sphi 0, %s23
    %s24 = sphi 0, %s21
    %s25 = sphi 0, %s24
    %s41 = sphi 0, %s25
    %s45 = sphi 0, %s45
    %s47 = sphi 0, %s45
    %s48 = sphi 0, %s47
    %s62 = sphi 0, %s48
    %s66 = sphi 0, %s66
    %s68 = sphi 0, %s66
    %s69 = sphi 0, %s68
    %s83 = sphi 0, %s69
    %s89 = sphi 0, %s91
    %s92 = sphi 0, %s89
    %s93 = sphi 0, %s92
    %s109 = sphi 0, %s93
    %s115 = sphi 0, %s117
    %s118 = sphi 0, %s115
    %s119 = sphi 0, %s118
    %s135 = sphi 0, %s119
  $region4: #{_basic_block_impl.3} parent=0 // loop_header_branch
    %14 = sbr.rel (%p12) target = $region8
  $region5: #{_basic_block_impl.3} parent=0 // loop_body
    %s16 = ssub.s32 %s11, 1
    %s17 = ssub.s32 %s11, 2
    %s18 = sadd.s32 %s11, 1
    %s19 = ssub.s32 %s11, %s18
    %p20 = scmp.eq.s32.totalorder %s19, 0
    %s22 = sadd.s32 %s21, 1
    %s23 = scalar_select %p20, %s21, %s22
    %p26 = pneg %p20
    %p27 = scmp.eq.s32.totalorder %s11, 1
    %p28 = por %p26, %p27
    %p29 = scmp.ne.s32.totalorder %s21, %s24
    %p30 = scmp.eq.s32.totalorder %s11, 0
    %p31 = por %p29, %p30
    %p32 = scmp.ne.s32.totalorder %s21, %s24
    %p33 = scmp.eq.s32.totalorder %s16, 1
    %p34 = por %p32, %p33
    %p35 = scmp.ne.s32.totalorder %s24, %s25
    %p36 = scmp.eq.s32.totalorder %s16, 0
    %p37 = por %p35, %p36
    %p38 = scmp.ne.s32.totalorder %s24, %s25
    %p39 = scmp.eq.s32.totalorder %s17, 1
    %p40 = por %p38, %p39
    %p42 = scmp.ne.s32.totalorder %s25, %s41
    %p43 = scmp.eq.s32.totalorder %s17, 0
    %p44 = por %p42, %p43
    %s46 = sadd.s32 %s45, 1
    %p49 = scmp.eq.s32.totalorder %s11, 1
    %p50 = scmp.ne.s32.totalorder %s45, %s47
    %p51 = scmp.eq.s32.totalorder %s11, 0
    %p52 = por %p50, %p51
    %p53 = scmp.ne.s32.totalorder %s45, %s47
    %p54 = scmp.eq.s32.totalorder %s16, 1
    %p55 = por %p53, %p54
    %p56 = scmp.ne.s32.totalorder %s47, %s48
    %p57 = scmp.eq.s32.totalorder %s16, 0
    %p58 = por %p56, %p57
    %p59 = scmp.ne.s32.totalorder %s47, %s48
    %p60 = scmp.eq.s32.totalorder %s17, 1
    %p61 = por %p59, %p60
    %p63 = scmp.ne.s32.totalorder %s48, %s62
    %p64 = scmp.eq.s32.totalorder %s17, 0
    %p65 = por %p63, %p64
    %s67 = sadd.s32 %s66, 1
    %p70 = scmp.eq.s32.totalorder %s11, 1
    %p71 = scmp.ne.s32.totalorder %s66, %s68
    %p72 = scmp.eq.s32.totalorder %s11, 0
    %p73 = por %p71, %p72
    %p74 = scmp.ne.s32.totalorder %s66, %s68
    %p75 = scmp.eq.s32.totalorder %s16, 1
    %p76 = por %p74, %p75
    %p77 = scmp.ne.s32.totalorder %s68, %s69
    %p78 = scmp.eq.s32.totalorder %s16, 0
    %p79 = por %p77, %p78
    %p80 = scmp.ne.s32.totalorder %s68, %s69
    %p81 = scmp.eq.s32.totalorder %s17, 1
    %p82 = por %p80, %p81
    %p84 = scmp.ne.s32.totalorder %s69, %s83
    %p85 = scmp.eq.s32.totalorder %s17, 0
    %p86 = por %p84, %p85
    %s87 = ssub.s32 %s11, %s18
    %p88 = scmp.eq.s32.totalorder %s87, 0
    %s90 = sadd.s32 %s89, 1
    %s91 = scalar_select %p88, %s89, %s90
    %p94 = pneg %p88
    %p95 = scmp.eq.s32.totalorder %s11, 1
    %p96 = por %p94, %p95
    %p97 = scmp.ne.s32.totalorder %s89, %s92
    %p98 = scmp.eq.s32.totalorder %s11, 0
    %p99 = por %p97, %p98
    %p100 = scmp.ne.s32.totalorder %s89, %s92
    %p101 = scmp.eq.s32.totalorder %s16, 1
    %p102 = por %p100, %p101
    %p103 = scmp.ne.s32.totalorder %s92, %s93
    %p104 = scmp.eq.s32.totalorder %s16, 0
    %p105 = por %p103, %p104
    %p106 = scmp.ne.s32.totalorder %s92, %s93
    %p107 = scmp.eq.s32.totalorder %s17, 1
    %p108 = por %p106, %p107
    %p110 = scmp.ne.s32.totalorder %s93, %s109
    %p111 = scmp.eq.s32.totalorder %s17, 0
    %p112 = por %p110, %p111
    %s113 = ssub.s32 %s11, %s18
    %p114 = scmp.eq.s32.totalorder %s113, 0
    %s116 = sadd.s32 %s115, 1
    %s117 = scalar_select %p114, %s115, %s116
    %p120 = pneg %p114
    %p121 = scmp.eq.s32.totalorder %s11, 1
    %p122 = por %p120, %p121
    %p123 = scmp.ne.s32.totalorder %s115, %s118
    %p124 = scmp.eq.s32.totalorder %s11, 0
    %p125 = por %p123, %p124
    %p126 = scmp.ne.s32.totalorder %s115, %s118
    %p127 = scmp.eq.s32.totalorder %s16, 1
    %p128 = por %p126, %p127
    %p129 = scmp.ne.s32.totalorder %s118, %s119
    %p130 = scmp.eq.s32.totalorder %s16, 0
    %p131 = por %p129, %p130
    %p132 = scmp.ne.s32.totalorder %s118, %s119
    %p133 = scmp.eq.s32.totalorder %s17, 1
    %p134 = por %p132, %p133
    %p136 = scmp.ne.s32.totalorder %s119, %s135
    %p137 = scmp.eq.s32.totalorder %s17, 0
    %p138 = por %p136, %p137
    %p139 = scmp.le.s32.totalorder 1, %s11
    %p140 = scmp.lt.s32.totalorder %s11, 3
    %p141 = pnand %p139, %p140
    %p142 = pneg %p141
    // Predicated region
    $region9: #{_basic_block_impl.3} parent=5 // pred_check
      _
    $region10: #{_basic_block_impl.3} parent=5 // pred_check_branch
      %144 = sbr.rel (%p141) target = $region12
    $region11: #{_basic_block_impl.3} parent=5 // pred_region
      %s145 = ssub.s32 %s11, 1
      // Predicated region
      $region13: #{_basic_block_impl.3} parent=11 // pred_check
        %p146 = pneg %p58
      $region14: #{_basic_block_impl.3} parent=11 // pred_check_branch
        %148 = sbr.rel (%p146) target = $region16
      $region15: #{_basic_block_impl.3} parent=11 // pred_region
        _
      $region16: #{_basic_block_impl.3} parent=11 // pred_fallthru
        _
      // Predicated region
      $region17: #{_basic_block_impl.3} parent=11 // pred_check
        %p149 = pneg %p79
      $region18: #{_basic_block_impl.3} parent=11 // pred_check_branch
        %151 = sbr.rel (%p149) target = $region20
      $region19: #{_basic_block_impl.3} parent=11 // pred_region
        _
      $region20: #{_basic_block_impl.3} parent=11 // pred_fallthru
        _
    $region12: #{_basic_block_impl.3} parent=5 // pred_fallthru
      _
    %p152 = scmp.lt.s32.totalorder %s11, 2
    // Predicated region
    $region21: #{_basic_block_impl.3} parent=5 // pred_check
      %p153 = pneg %p152
    $region22: #{_basic_block_impl.3} parent=5 // pred_check_branch
      %155 = sbr.rel (%p153) target = $region24
    $region23: #{_basic_block_impl.3} parent=5 // pred_region
      // Predicated region
      $region25: #{_basic_block_impl.3} parent=23 // pred_check
        %p156 = pneg %p31
      $region26: #{_basic_block_impl.3} parent=23 // pred_check_branch
        %158 = sbr.rel (%p156) target = $region28
      $region27: #{_basic_block_impl.3} parent=23 // pred_region
        %p159 = scmp.lt.s32.totalorder %s11, 1
        %s160 = scalar_select %p159, %s11, 1
        %s161 = smul.addr %s160, 3
        %s162 = smul.addr %s161, 2
        %s163 = scalar_lea.vmem %s0, %s162
      $region28: #{_basic_block_impl.3} parent=23 // pred_fallthru
        _
    $region24: #{_basic_block_impl.3} parent=5 // pred_fallthru
      _
    %p164 = scmp.le.s32.totalorder 1, %s11
    %p165 = scmp.lt.s32.totalorder %s11, 3
    %p166 = pnand %p164, %p165
    %p167 = pneg %p166
    // Predicated region
    $region29: #{_basic_block_impl.3} parent=5 // pred_check
      _
    $region30: #{_basic_block_impl.3} parent=5 // pred_check_branch
      %169 = sbr.rel (%p166) target = $region32
    $region31: #{_basic_block_impl.3} parent=5 // pred_region
      %s170 = ssub.s32 %s11, 1
      %p171 = scmp.lt.s32.totalorder %s16, 1
      %s172 = scalar_select %p171, %s16, 1
      %s173 = smul.addr %s172, 3
      %s174 = smul.addr %s173, 2
      %s175 = scalar_lea.vmem %s0, %s174
      %p176 = pneg %p37
      %p177 = pneg %p34
      %p178 = pneg %p58
      %p179 = pneg %p55
      %p180 = pneg %p79
      %p181 = pneg %p76
      %p182 = pneg %p105
      %p183 = pneg %p102
      %p184 = scmp.lt.s32.totalorder %s16, 1
      %s185 = scalar_select %p184, %s16, 1
      %s186 = smul.addr %s185, 3
      %s187 = smul.addr %s186, 4
      %s188 = scalar_lea.vmem %s3, %s187
      %p189 = pneg %p131
      %p190 = pneg %p128
      %p191 = scmp.lt.s32.totalorder %s16, 1
      %s192 = scalar_select %p191, %s16, 1
      %s193 = smul.addr %s192, 4
      %s194 = scalar_lea.vmem %s4, %s193
      %p195 = scmp.lt.s32.totalorder %s16, 1
      %s196 = scalar_select %p195, %s16, 1
      %s197 = smul.addr %s196, 3
      %s198 = smul.addr %s197, 2
      %s199 = scalar_lea.vmem %s0, %s198
      %p200 = scmp.lt.s32.totalorder %s16, 1
      %s201 = scalar_select %p200, %s16, 1
      %s202 = smul.addr %s201, 3
      %s203 = smul.addr %s202, 4
      %s204 = scalar_lea.vmem %s3, %s203
      %p205 = scmp.lt.s32.totalorder %s16, 1
      %s206 = scalar_select %p205, %s16, 1
      %s207 = smul.addr %s206, 4
      %s208 = scalar_lea.vmem %s4, %s207
      %v210 = vld [vmem:[%s199] sm:$0x3f]
      %212 = vst [vmem:[#allocation1] ss:$2 sm:$0xff] %v210
      %v213 = vld.sshfl [vmem:[#allocation1] sm:$0xff pattern:$0x75643120]
      %v214 = vld.sshfl [vmem:[#allocation1 + $0x8] sm:$0xff pattern:$0x75643120]
      %217 = vst [vmem:[#allocation2] sm:$0x33] %v213
      %vm218 = vcmask 254976
      %219 = vst.msk [vmem:[#allocation2 + $0x8] sm:$0x3] %vm218, %v214
      %v220 = vld [vmem:[%s199] sm:$0x3f]
      %s222 = scalar_lea.vmem [#allocation1], 1
      %223 = vst [vmem:[%s222] ss:$2 sm:$0xff] %v220
      %v224 = vld.sshfl [vmem:[#allocation1] sm:$0xff pattern:$0x75643120]
      %v226 = vld.sshfl [vmem:[#allocation1 + $0x8] sm:$0xff pattern:$0x75643120]
      %228 = vrot.lane.b32.xlu0 %v224, 127
      %v229 = vpop.permute.xlu0 %228
      %230 = vrot.lane.b32.xlu0 %v226, 127
      %v231 = vpop.permute.xlu0 %230
      %v232 = vrot.slane %v229, 4
      %v233 = vrot.slane %v231, 4
      %vm234 = vcmask 1043456
      %v235 = vsel %vm234, %v232, %v233
      %vm236 = vcmask 1039360
      %v237 = vsel %vm236, %v229, %v235
      %240 = vst [vmem:[#allocation2] sm:$0xcc] %v237
      %vm241 = vcmask 257026
      %242 = vst.msk [vmem:[#allocation2 + $0x8] sm:$0xc] %vm241, %v231
      %v243 = vld [vmem:[%s199] sm:$0x3f]
      %245 = vst [vmem:[#allocation1] ss:$2 sm:$0xff] %v243
      %v246 = vld.sshfl [vmem:[#allocation1] sm:$0xff pattern:$0x75643120]
      %v248 = vld.sshfl [vmem:[#allocation1 + $0x8] sm:$0xff pattern:$0x75643120]
      %250 = vrot.lane.b32.xlu0 %v246, 126
      %v251 = vpop.permute.xlu0 %250
      %252 = vrot.lane.b32.xlu0 %v248, 126
      %v253 = vpop.permute.xlu0 %252
      %v254 = vrot.slane %v251, 4
      %v255 = vrot.slane %v253, 4
      %v256 = vsel %vm234, %v254, %v255
      %vm257 = vcmask 1031168
      %v258 = vsel %vm257, %v251, %v256
      %261 = vst [vmem:[#allocation2 + $0xc] sm:$0x33] %v258
      %262 = vst.msk [vmem:[#allocation2 + $0x14] sm:$0x3] %vm218, %v253
      %v263 = vld [vmem:[%s199] sm:$0x3f]
      %s265 = scalar_lea.vmem [#allocation1], 1
      %266 = vst [vmem:[%s265] ss:$2 sm:$0xff] %v263
      %v267 = vld.sshfl [vmem:[#allocation1] sm:$0xff pattern:$0x75643120]
      %v269 = vld.sshfl [vmem:[#allocation1 + $0x8] sm:$0xff pattern:$0x75643120]
      %271 = vrot.lane.b32.xlu0 %v267, 110
      %v272 = vpop.permute.xlu0 %271
      %273 = vrot.lane.b32.xlu0 %v269, 110
      %v274 = vpop.permute.xlu0 %273
      %v275 = vrot.slane %v272, 4
      %v276 = vrot.slane %v274, 4
      %v277 = vsel %vm234, %v275, %v276
      %vm278 = vcmask 900096
      %v279 = vsel %vm278, %v272, %v277
      %282 = vst [vmem:[#allocation2 + $0xc] sm:$0xcc] %v279
      %283 = vst.msk [vmem:[#allocation2 + $0x14] sm:$0xc] %vm241, %v274
      %v284 = vld [vmem:[%s199] sm:$0x3f]
      %286 = vst [vmem:[#allocation1] ss:$2 sm:$0xff] %v284
      %v287 = vld.sshfl [vmem:[#allocation1] sm:$0xff pattern:$0x75643120]
      %v289 = vld.sshfl [vmem:[#allocation1 + $0x8] sm:$0xff pattern:$0x75643120]
      %291 = vrot.lane.b32.xlu0 %v287, 109
      %v292 = vpop.permute.xlu0 %291
      %293 = vrot.lane.b32.xlu0 %v289, 109
      %v294 = vpop.permute.xlu0 %293
      %v295 = vrot.slane %v292, 4
      %v296 = vrot.slane %v294, 4
      %v297 = vsel %vm234, %v295, %v296
      %vm298 = vcmask 891904
      %v299 = vsel %vm298, %v292, %v297
      %302 = vst [vmem:[#allocation2 + $0x18] sm:$0x33] %v299
      %303 = vst.msk [vmem:[#allocation2 + $0x20] sm:$0x3] %vm218, %v294
      %v304 = vld [vmem:[%s199] sm:$0x3f]
      %s306 = scalar_lea.vmem [#allocation1], 1
      %307 = vst [vmem:[%s306] ss:$2 sm:$0xff] %v304
      %v308 = vld.sshfl [vmem:[#allocation1] sm:$0xff pattern:$0x75643120]
      %v310 = vld.sshfl [vmem:[#allocation1 + $0x8] sm:$0xff pattern:$0x75643120]
      %312 = vrot.lane.b32.xlu0 %v308, 108
      %v313 = vpop.permute.xlu0 %312
      %314 = vrot.lane.b32.xlu0 %v310, 108
      %v315 = vpop.permute.xlu0 %314
      %v316 = vrot.slane %v313, 4
      %v317 = vrot.slane %v315, 4
      %v318 = vsel %vm234, %v316, %v317
      %vm319 = vcmask 883712
      %v320 = vsel %vm319, %v313, %v318
      %323 = vst [vmem:[#allocation2 + $0x18] sm:$0xcc] %v320
      %324 = vst.msk [vmem:[#allocation2 + $0x20] sm:$0xc] %vm241, %v315
      %v325 = vld [vmem:[%s199] sm:$0x3f]
      %327 = vst [vmem:[#allocation1] ss:$2 sm:$0xff] %v325
      %v328 = vld.sshfl [vmem:[#allocation1] sm:$0xff pattern:$0x75643120]
      %v330 = vld.sshfl [vmem:[#allocation1 + $0x8] sm:$0xff pattern:$0x75643120]
      %332 = vrot.lane.b32.xlu0 %v328, 92
      %v333 = vpop.permute.xlu0 %332
      %334 = vrot.lane.b32.xlu0 %v330, 92
      %v335 = vpop.permute.xlu0 %334
      %v336 = vrot.slane %v333, 4
      %v337 = vrot.slane %v335, 4
      %v338 = vsel %vm234, %v336, %v337
      %vm339 = vcmask 752640
      %v340 = vsel %vm339, %v333, %v338
      %343 = vst [vmem:[#allocation2 + $0x24] sm:$0x33] %v340
      %344 = vst.msk [vmem:[#allocation2 + $0x2c] sm:$0x3] %vm218, %v335
      %v345 = vld [vmem:[%s199] sm:$0x3f]
      %s347 = scalar_lea.vmem [#allocation1], 1
      %348 = vst [vmem:[%s347] ss:$2 sm:$0xff] %v345
      %v349 = vld.sshfl [vmem:[#allocation1] sm:$0xff pattern:$0x75643120]
      %v351 = vld.sshfl [vmem:[#allocation1 + $0x8] sm:$0xff pattern:$0x75643120]
      %353 = vrot.lane.b32.xlu0 %v349, 91
      %v354 = vpop.permute.xlu0 %353
      %355 = vrot.lane.b32.xlu0 %v351, 91
      %v356 = vpop.permute.xlu0 %355
      %v357 = vrot.slane %v354, 4
      %v358 = vrot.slane %v356, 4
      %v359 = vsel %vm234, %v357, %v358
      %vm360 = vcmask 744448
      %v361 = vsel %vm360, %v354, %v359
      %364 = vst [vmem:[#allocation2 + $0x24] sm:$0xcc] %v361
      %365 = vst.msk [vmem:[#allocation2 + $0x2c] sm:$0xc] %vm241, %v356
      %v366 = vld [vmem:[%s199] sm:$0x3f]
      %368 = vst [vmem:[#allocation1] ss:$2 sm:$0xff] %v366
      %v369 = vld.sshfl [vmem:[#allocation1] sm:$0xff pattern:$0x75643120]
      %v371 = vld.sshfl [vmem:[#allocation1 + $0x8] sm:$0xff pattern:$0x75643120]
      %373 = vrot.lane.b32.xlu0 %v369, 90
      %v374 = vpop.permute.xlu0 %373
      %375 = vrot.lane.b32.xlu0 %v371, 90
      %v376 = vpop.permute.xlu0 %375
      %v377 = vrot.slane %v374, 4
      %v378 = vrot.slane %v376, 4
      %v379 = vsel %vm234, %v377, %v378
      %vm380 = vcmask 736256
      %v381 = vsel %vm380, %v374, %v379
      %384 = vst [vmem:[#allocation2 + $0x30] sm:$0x33] %v381
      %385 = vst.msk [vmem:[#allocation2 + $0x38] sm:$0x3] %vm218, %v376
      %v386 = vld [vmem:[%s1] sm:$0x3]
      %v387 = vld [vmem:[#allocation2] sm:$0xff]
      %v388 = vld [vmem:[#allocation2 + $0x8] sm:$0xf]
      %v389 = vld [vmem:[#allocation2 + $0xc] sm:$0xff]
      %v390 = vld [vmem:[#allocation2 + $0x14] sm:$0xf]
      %v391 = vld [vmem:[#allocation2 + $0x18] sm:$0xff]
      %v392 = vld [vmem:[#allocation2 + $0x20] sm:$0xf]
      %v393 = vld [vmem:[#allocation2 + $0x24] sm:$0xff]
      %v394 = vld [vmem:[#allocation2 + $0x2c] sm:$0xf]
      %v395 = vld [vmem:[#allocation2 + $0x30] sm:$0x33]
      %v396 = vld [vmem:[#allocation2 + $0x38] sm:$0x3]
      %v407 = vunpack.c.l.b16 %v387
      %v408 = vunpack.c.h.b16 %v387
      %v409 = vunpack.c.l.b16 %v388
      %v410 = vunpack.c.l.b16 %v389
      %v411 = vunpack.c.h.b16 %v389
      %v412 = vunpack.c.l.b16 %v390
      %v413 = vunpack.c.l.b16 %v391
      %v414 = vunpack.c.h.b16 %v391
      %v415 = vunpack.c.l.b16 %v392
      %v416 = vunpack.c.l.b16 %v393
      %v417 = vunpack.c.h.b16 %v393
      %v418 = vunpack.c.l.b16 %v394
      %v419 = vunpack.c.l.b16 %v395
      %v420 = vunpack.c.h.b16 %v395
      %v421 = vunpack.c.l.b16 %v396
      %v422 = vpack.c.b16 %v410, %v407
      %v423 = vpack.c.b16 %v411, %v408
      %v424 = vpack.c.b16 %v412, %v409
      %v425 = vpack.c.b16 %v416, %v413
      %v426 = vpack.c.b16 %v417, %v414
      %v427 = vpack.c.b16 %v418, %v415
      %v428 = vpack.c.b16 %v419, %v419
      %v429 = vpack.c.b16 %v420, %v420
      %v430 = vpack.c.b16 %v421, %v421
      %vm437 = vcmask 293888
      %v439 = vsel %vm437, %v386, 0
      %vm441 = vcmask 1041408
      %v443 = vsel %vm441, %v428, 0
      %v446 = vsel %vm441, %v429, 0
      %v449 = vsel %vm441, %v430, 0
      %451 = vmatpush.bf16.msra.mxu0 0
      %452 = vmatpush.bf16.msra.mxu0 0
      %453 = vmatpush.bf16.msra.mxu0 0
      %454 = vmatpush.bf16.msra.mxu0 0
      %455 = vmatpush.bf16.msra.mxu0 0
      %456 = vmatpush.bf16.msra.mxu0 %v443
      %457 = vmatpush.bf16.msra.mxu0 %v425
      %458 = vmatpush.bf16.msra.mxu0 %v422
      %459 = vmatmul.bf16.gmra.mxu0 %v439
      %v460 = vpop.f32.mrf.mxu0
      %v461 = vadd.f32 0.0, %v460
      %v462 = vpop.f32.mrf.mxu0
      %463 = vdwg.mxu0
      %464 = vmatpush.bf16.msra.mxu0 0
      %465 = vmatpush.bf16.msra.mxu0 0
      %466 = vmatpush.bf16.msra.mxu0 0
      %467 = vmatpush.bf16.msra.mxu0 0
      %468 = vmatpush.bf16.msra.mxu0 0
      %469 = vmatpush.bf16.msra.mxu0 %v446
      %470 = vmatpush.bf16.msra.mxu0 %v426
      %471 = vmatpush.bf16.msra.mxu0 %v423
      %472 = vmatmul.bf16.gmra.mxu0 %v439
      %v473 = vpop.f32.mrf.mxu0
      %v474 = vadd.f32 0.0, %v473
      %v475 = vpop.f32.mrf.mxu0
      %476 = vdwg.mxu0
      %477 = vmatpush.bf16.msra.mxu0 0
      %478 = vmatpush.bf16.msra.mxu0 0
      %479 = vmatpush.bf16.msra.mxu0 0
      %480 = vmatpush.bf16.msra.mxu0 0
      %481 = vmatpush.bf16.msra.mxu0 0
      %482 = vmatpush.bf16.msra.mxu0 %v449
      %483 = vmatpush.bf16.msra.mxu0 %v427
      %484 = vmatpush.bf16.msra.mxu0 %v424
      %485 = vmatmul.bf16.gmra.mxu0 %v439
      %v486 = vpop.f32.mrf.mxu0
      %v487 = vadd.f32 0.0, %v486
      %v488 = vpop.f32.mrf.mxu0
      %489 = vdwg.mxu0
      %v492 = vrot.slane %v474, 4
      %vm493 = vcmask 1043456
      %v494 = vsel %vm493, %v461, %v492
      %496 = vst [vmem:[%s204] sm:$0xff] %v494
      %vm497 = vcmask 257024
      %498 = vst.msk [vmem:[%s204 + $0x8] sm:$0xf] %vm497, %v487
      %v499 = vld [vmem:[%s2] sm:$0x7]
      %v501 = vperm.slane %v499, 0
      %v502 = vperm.slane %v499, 1
      %v503 = vperm.slane %v499, 2
      %v507 = vmul.f32 %v461, %v501
      %v508 = vmul.f32 %v474, %v502
      %v509 = vmul.f32 %v487, %v503
      %v510 = vsel %vm493, %v507, 0.0
      %v511 = vsel %vm493, %v508, 0.0
      %v512 = vadd.f32 %v510, %v511
      %v513 = vsel %vm497, %v509, 0.0
      %v514 = vadd.f32 %v512, %v513
      %515 = vadd.xlane.f32.xlu0 %v514
      %v516 = vpop.xlane.xlu0 %515
      %v517 = vmul.f32 %v507, %v461
      %v518 = vmul.f32 %v508, %v474
      %v519 = vmul.f32 %v509, %v487
      %v520 = vsel %vm493, %v517, 0.0
      %v521 = vsel %vm493, %v518, 0.0
      %v522 = vadd.f32 %v520, %v521
      %v523 = vsel %vm497, %v519, 0.0
      %v524 = vadd.f32 %v522, %v523
      %525 = vadd.xlane.f32.xlu0 %v524
      %v526 = vpop.xlane.xlu0 %525
      %vm527 = vcmask 7168
      %v528 = vsel %vm527, %v516, %v526
      %vm529 = vcmask 11264
      %530 = vst.msk [vmem:[%s208] sm:$0xf] %vm529, %v528
      %p531 = scmp.lt.s32.totalorder %s16, 1
      %s532 = scalar_select %p531, %s16, 1
      %s533 = smul.addr %s532, 3
      %s534 = smul.addr %s533, 4
      %s535 = scalar_lea.vmem %s3, %s534
      %p536 = scmp.lt.s32.totalorder %s16, 1
      %s537 = scalar_select %p536, %s16, 1
      %s538 = smul.addr %s537, 4
      %s539 = scalar_lea.vmem %s4, %s538
      // Predicated region
      $region33: #{_basic_block_impl.3} parent=31 // pred_check
        %p540 = pneg %p102
      $region34: #{_basic_block_impl.3} parent=31 // pred_check_branch
        %542 = sbr.rel (%p540) target = $region36
      $region35: #{_basic_block_impl.3} parent=31 // pred_region
        _
      $region36: #{_basic_block_impl.3} parent=31 // pred_fallthru
        _
      // Predicated region
      $region37: #{_basic_block_impl.3} parent=31 // pred_check
        %p543 = pneg %p128
      $region38: #{_basic_block_impl.3} parent=31 // pred_check_branch
        %545 = sbr.rel (%p543) target = $region40
      $region39: #{_basic_block_impl.3} parent=31 // pred_region
        _
      $region40: #{_basic_block_impl.3} parent=31 // pred_fallthru
        _
    $region32: #{_basic_block_impl.3} parent=5 // pred_fallthru
      _
    %p546 = scmp.le.s32.totalorder 2, %s11
    // Predicated region
    $region41: #{_basic_block_impl.3} parent=5 // pred_check
      %p547 = pneg %p546
    $region42: #{_basic_block_impl.3} parent=5 // pred_check_branch
      %549 = sbr.rel (%p547) target = $region44
    $region43: #{_basic_block_impl.3} parent=5 // pred_region
      %s550 = ssub.s32 %s11, 2
      // Predicated region
      $region45: #{_basic_block_impl.3} parent=43 // pred_check
        %p551 = pneg %p108
      $region46: #{_basic_block_impl.3} parent=43 // pred_check_branch
        %553 = sbr.rel (%p551) target = $region48
      $region47: #{_basic_block_impl.3} parent=43 // pred_region
        %p554 = scmp.lt.s32.totalorder %s17, 1
        %s555 = scalar_select %p554, %s17, 1
        %s556 = smul.addr %s555, 3
        %s557 = smul.addr %s556, 4
        %s558 = scalar_lea.vmem %s3, %s557
      $region48: #{_basic_block_impl.3} parent=43 // pred_fallthru
        _
      // Predicated region
      $region49: #{_basic_block_impl.3} parent=43 // pred_check
        %p559 = pneg %p134
      $region50: #{_basic_block_impl.3} parent=43 // pred_check_branch
        %561 = sbr.rel (%p559) target = $region52
      $region51: #{_basic_block_impl.3} parent=43 // pred_region
        %p562 = scmp.lt.s32.totalorder %s17, 1
        %s563 = scalar_select %p562, %s17, 1
        %s564 = smul.addr %s563, 4
        %s565 = scalar_lea.vmem %s4, %s564
      $region52: #{_basic_block_impl.3} parent=43 // pred_fallthru
        _
    $region44: #{_basic_block_impl.3} parent=5 // pred_fallthru
      _
  $region6: #{_basic_block_impl.3} parent=0 // loop_footer
    %s15 = sadd.s32 1, %s11
  $region7: #{_basic_block_impl.3} parent=0 // loop_footer_branch
    %10 = sbr.rel target = $region3
  $region8: #{_basic_block_impl.3} parent=0 // loop_exit
    _

// kernel: _basic_block_impl.4
$region0: #{_basic_block_impl.4}
  #allocation0 [shape = 'u32[]', space=smem, size = 0x4, offset = 0x4, fixed_abs, tag = 'smem constant byte address 0x4 - core index']
  #allocation1 [shape = 'u32[72,128]{1,0:T(1,128)}', space=vmem, size = 0x9000, scoped, tag = 'internal scratch']
  #allocation2 [shape = 'bf16[4,326]{1,0:T(4,128)(2,1)}', space=vmem, size = 0xc00, scoped, tag = 'scratch operand']
  #allocation3 [shape = 'bf16[36,288]{1,0:T(8,128)(2,1)}', space=vmem, size = 0x7800, scoped, tag = 'scratch operand']
  %s0 = inlined_call_operand.vmem [shape: f32[2,4,288], index: 0, kind: input, shape index: {}]
  %s1 = inlined_call_operand.vmem [shape: f32[4,2], index: 1, kind: input, shape index: {}]
  %s2 = inlined_call_operand.vmem [shape: f32[4,1], index: 2, kind: input, shape index: {}]
  %s3 = inlined_call_operand.vmem [shape: f32[4,1], index: 3, kind: input, shape index: {}]
  %s4 = inlined_call_operand.vmem [shape: f32[1,288], index: 4, kind: input, shape index: {}]
  %s5 = inlined_call_operand.vmem [shape: bf16[4,36], index: 5, kind: input, shape index: {}]
  %s6 = inlined_call_operand.vmem [shape: f32[2,4,288], index: 6, kind: output, shape index: {0}]
  %s7 = inlined_call_operand.vmem [shape: f32[2,4,2], index: 7, kind: output, shape index: {1}]
  %8 = xla_tuple %s6, %s7
  %s9 = sld [smem:[#allocation0]]
  $region65: #{_basic_block_impl.4} parent=0
    _
  %s11 = ssub.s32 1, %s9
  %s12 = scalar_select 0, %s11, %s9
  loop: start=0, step=1, limit=4
  $region2: #{_basic_block_impl.4} parent=0 // loop_pre_header
    _
  $region3: #{_basic_block_impl.4} parent=0 // loop_header
    %s14 = sphi 0, %s18
    %p15 = scmp.ge.s32.totalorder %s14, 4
    %s24 = sphi 0, %s26
    %s27 = sphi 0, %s24
    %s28 = sphi 0, %s27
    %s44 = sphi 0, %s28
    %s48 = sphi 0, %s48
    %s50 = sphi 0, %s48
    %s51 = sphi 0, %s50
    %s65 = sphi 0, %s51
    %s69 = sphi 0, %s69
    %s71 = sphi 0, %s69
    %s72 = sphi 0, %s71
    %s86 = sphi 0, %s72
    %s90 = sphi 0, %s90
    %s92 = sphi 0, %s90
    %s93 = sphi 0, %s92
    %s107 = sphi 0, %s93
    %s111 = sphi 0, %s111
    %s113 = sphi 0, %s111
    %s114 = sphi 0, %s113
    %s128 = sphi 0, %s114
    %s132 = sphi 0, %s132
    %s134 = sphi 0, %s132
    %s135 = sphi 0, %s134
    %s149 = sphi 0, %s135
    %s155 = sphi 0, %s157
    %s158 = sphi 0, %s155
    %s159 = sphi 0, %s158
    %s175 = sphi 0, %s159
    %s181 = sphi 0, %s183
    %s184 = sphi 0, %s181
    %s185 = sphi 0, %s184
    %s201 = sphi 0, %s185
  $region4: #{_basic_block_impl.4} parent=0 // loop_header_branch
    %17 = sbr.rel (%p15) target = $region8
  $region5: #{_basic_block_impl.4} parent=0 // loop_body
    %s19 = ssub.s32 %s14, 1
    %s20 = ssub.s32 %s14, 2
    %s21 = sadd.s32 %s14, 1
    %s22 = ssub.s32 %s14, %s21
    %p23 = scmp.eq.s32.totalorder %s22, 0
    %s25 = sadd.s32 %s24, 1
    %s26 = scalar_select %p23, %s24, %s25
    %p29 = pneg %p23
    %p30 = scmp.eq.s32.totalorder %s14, 1
    %p31 = por %p29, %p30
    %p32 = scmp.ne.s32.totalorder %s24, %s27
    %p33 = scmp.eq.s32.totalorder %s14, 0
    %p34 = por %p32, %p33
    %p35 = scmp.ne.s32.totalorder %s24, %s27
    %p36 = scmp.eq.s32.totalorder %s19, 1
    %p37 = por %p35, %p36
    %p38 = scmp.ne.s32.totalorder %s27, %s28
    %p39 = scmp.eq.s32.totalorder %s19, 0
    %p40 = por %p38, %p39
    %p41 = scmp.ne.s32.totalorder %s27, %s28
    %p42 = scmp.eq.s32.totalorder %s20, 1
    %p43 = por %p41, %p42
    %p45 = scmp.ne.s32.totalorder %s28, %s44
    %p46 = scmp.eq.s32.totalorder %s20, 0
    %p47 = por %p45, %p46
    %s49 = sadd.s32 %s48, 1
    %p52 = scmp.eq.s32.totalorder %s14, 1
    %p53 = scmp.ne.s32.totalorder %s48, %s50
    %p54 = scmp.eq.s32.totalorder %s14, 0
    %p55 = por %p53, %p54
    %p56 = scmp.ne.s32.totalorder %s48, %s50
    %p57 = scmp.eq.s32.totalorder %s19, 1
    %p58 = por %p56, %p57
    %p59 = scmp.ne.s32.totalorder %s50, %s51
    %p60 = scmp.eq.s32.totalorder %s19, 0
    %p61 = por %p59, %p60
    %p62 = scmp.ne.s32.totalorder %s50, %s51
    %p63 = scmp.eq.s32.totalorder %s20, 1
    %p64 = por %p62, %p63
    %p66 = scmp.ne.s32.totalorder %s51, %s65
    %p67 = scmp.eq.s32.totalorder %s20, 0
    %p68 = por %p66, %p67
    %s70 = sadd.s32 %s69, 1
    %p73 = scmp.eq.s32.totalorder %s14, 1
    %p74 = scmp.ne.s32.totalorder %s69, %s71
    %p75 = scmp.eq.s32.totalorder %s14, 0
    %p76 = por %p74, %p75
    %p77 = scmp.ne.s32.totalorder %s69, %s71
    %p78 = scmp.eq.s32.totalorder %s19, 1
    %p79 = por %p77, %p78
    %p80 = scmp.ne.s32.totalorder %s71, %s72
    %p81 = scmp.eq.s32.totalorder %s19, 0
    %p82 = por %p80, %p81
    %p83 = scmp.ne.s32.totalorder %s71, %s72
    %p84 = scmp.eq.s32.totalorder %s20, 1
    %p85 = por %p83, %p84
    %p87 = scmp.ne.s32.totalorder %s72, %s86
    %p88 = scmp.eq.s32.totalorder %s20, 0
    %p89 = por %p87, %p88
    %s91 = sadd.s32 %s90, 1
    %p94 = scmp.eq.s32.totalorder %s14, 1
    %p95 = scmp.ne.s32.totalorder %s90, %s92
    %p96 = scmp.eq.s32.totalorder %s14, 0
    %p97 = por %p95, %p96
    %p98 = scmp.ne.s32.totalorder %s90, %s92
    %p99 = scmp.eq.s32.totalorder %s19, 1
    %p100 = por %p98, %p99
    %p101 = scmp.ne.s32.totalorder %s92, %s93
    %p102 = scmp.eq.s32.totalorder %s19, 0
    %p103 = por %p101, %p102
    %p104 = scmp.ne.s32.totalorder %s92, %s93
    %p105 = scmp.eq.s32.totalorder %s20, 1
    %p106 = por %p104, %p105
    %p108 = scmp.ne.s32.totalorder %s93, %s107
    %p109 = scmp.eq.s32.totalorder %s20, 0
    %p110 = por %p108, %p109
    %s112 = sadd.s32 %s111, 1
    %p115 = scmp.eq.s32.totalorder %s14, 1
    %p116 = scmp.ne.s32.totalorder %s111, %s113
    %p117 = scmp.eq.s32.totalorder %s14, 0
    %p118 = por %p116, %p117
    %p119 = scmp.ne.s32.totalorder %s111, %s113
    %p120 = scmp.eq.s32.totalorder %s19, 1
    %p121 = por %p119, %p120
    %p122 = scmp.ne.s32.totalorder %s113, %s114
    %p123 = scmp.eq.s32.totalorder %s19, 0
    %p124 = por %p122, %p123
    %p125 = scmp.ne.s32.totalorder %s113, %s114
    %p126 = scmp.eq.s32.totalorder %s20, 1
    %p127 = por %p125, %p126
    %p129 = scmp.ne.s32.totalorder %s114, %s128
    %p130 = scmp.eq.s32.totalorder %s20, 0
    %p131 = por %p129, %p130
    %s133 = sadd.s32 %s132, 1
    %p136 = scmp.eq.s32.totalorder %s14, 1
    %p137 = scmp.ne.s32.totalorder %s132, %s134
    %p138 = scmp.eq.s32.totalorder %s14, 0
    %p139 = por %p137, %p138
    %p140 = scmp.ne.s32.totalorder %s132, %s134
    %p141 = scmp.eq.s32.totalorder %s19, 1
    %p142 = por %p140, %p141
    %p143 = scmp.ne.s32.totalorder %s134, %s135
    %p144 = scmp.eq.s32.totalorder %s19, 0
    %p145 = por %p143, %p144
    %p146 = scmp.ne.s32.totalorder %s134, %s135
    %p147 = scmp.eq.s32.totalorder %s20, 1
    %p148 = por %p146, %p147
    %p150 = scmp.ne.s32.totalorder %s135, %s149
    %p151 = scmp.eq.s32.totalorder %s20, 0
    %p152 = por %p150, %p151
    %s153 = ssub.s32 %s14, %s21
    %p154 = scmp.eq.s32.totalorder %s153, 0
    %s156 = sadd.s32 %s155, 1
    %s157 = scalar_select %p154, %s155, %s156
    %p160 = pneg %p154
    %p161 = scmp.eq.s32.totalorder %s14, 1
    %p162 = por %p160, %p161
    %p163 = scmp.ne.s32.totalorder %s155, %s158
    %p164 = scmp.eq.s32.totalorder %s14, 0
    %p165 = por %p163, %p164
    %p166 = scmp.ne.s32.totalorder %s155, %s158
    %p167 = scmp.eq.s32.totalorder %s19, 1
    %p168 = por %p166, %p167
    %p169 = scmp.ne.s32.totalorder %s158, %s159
    %p170 = scmp.eq.s32.totalorder %s19, 0
    %p171 = por %p169, %p170
    %p172 = scmp.ne.s32.totalorder %s158, %s159
    %p173 = scmp.eq.s32.totalorder %s20, 1
    %p174 = por %p172, %p173
    %p176 = scmp.ne.s32.totalorder %s159, %s175
    %p177 = scmp.eq.s32.totalorder %s20, 0
    %p178 = por %p176, %p177
    %s179 = ssub.s32 %s14, %s21
    %p180 = scmp.eq.s32.totalorder %s179, 0
    %s182 = sadd.s32 %s181, 1
    %s183 = scalar_select %p180, %s181, %s182
    %p186 = pneg %p180
    %p187 = scmp.eq.s32.totalorder %s14, 1
    %p188 = por %p186, %p187
    %p189 = scmp.ne.s32.totalorder %s181, %s184
    %p190 = scmp.eq.s32.totalorder %s14, 0
    %p191 = por %p189, %p190
    %p192 = scmp.ne.s32.totalorder %s181, %s184
    %p193 = scmp.eq.s32.totalorder %s19, 1
    %p194 = por %p192, %p193
    %p195 = scmp.ne.s32.totalorder %s184, %s185
    %p196 = scmp.eq.s32.totalorder %s19, 0
    %p197 = por %p195, %p196
    %p198 = scmp.ne.s32.totalorder %s184, %s185
    %p199 = scmp.eq.s32.totalorder %s20, 1
    %p200 = por %p198, %p199
    %p202 = scmp.ne.s32.totalorder %s185, %s201
    %p203 = scmp.eq.s32.totalorder %s20, 0
    %p204 = por %p202, %p203
    %p205 = scmp.le.s32.totalorder 1, %s14
    %p206 = scmp.lt.s32.totalorder %s14, 3
    %p207 = pnand %p205, %p206
    %p208 = pneg %p207
    // Predicated region
    $region9: #{_basic_block_impl.4} parent=5 // pred_check
      _
    $region10: #{_basic_block_impl.4} parent=5 // pred_check_branch
      %210 = sbr.rel (%p207) target = $region12
    $region11: #{_basic_block_impl.4} parent=5 // pred_region
      %s211 = ssub.s32 %s14, 1
      // Predicated region
      $region13: #{_basic_block_impl.4} parent=11 // pred_check
        %p212 = pneg %p61
      $region14: #{_basic_block_impl.4} parent=11 // pred_check_branch
        %214 = sbr.rel (%p212) target = $region16
      $region15: #{_basic_block_impl.4} parent=11 // pred_region
        _
      $region16: #{_basic_block_impl.4} parent=11 // pred_fallthru
        _
      // Predicated region
      $region17: #{_basic_block_impl.4} parent=11 // pred_check
        %p215 = pneg %p82
      $region18: #{_basic_block_impl.4} parent=11 // pred_check_branch
        %217 = sbr.rel (%p215) target = $region20
      $region19: #{_basic_block_impl.4} parent=11 // pred_region
        _
      $region20: #{_basic_block_impl.4} parent=11 // pred_fallthru
        _
      // Predicated region
      $region21: #{_basic_block_impl.4} parent=11 // pred_check
        %p218 = pneg %p103
      $region22: #{_basic_block_impl.4} parent=11 // pred_check_branch
        %220 = sbr.rel (%p218) target = $region24
      $region23: #{_basic_block_impl.4} parent=11 // pred_region
        _
      $region24: #{_basic_block_impl.4} parent=11 // pred_fallthru
        _
      // Predicated region
      $region25: #{_basic_block_impl.4} parent=11 // pred_check
        %p221 = pneg %p124
      $region26: #{_basic_block_impl.4} parent=11 // pred_check_branch
        %223 = sbr.rel (%p221) target = $region28
      $region27: #{_basic_block_impl.4} parent=11 // pred_region
        _
      $region28: #{_basic_block_impl.4} parent=11 // pred_fallthru
        _
      // Predicated region
      $region29: #{_basic_block_impl.4} parent=11 // pred_check
        %p224 = pneg %p145
      $region30: #{_basic_block_impl.4} parent=11 // pred_check_branch
        %226 = sbr.rel (%p224) target = $region32
      $region31: #{_basic_block_impl.4} parent=11 // pred_region
        _
      $region32: #{_basic_block_impl.4} parent=11 // pred_fallthru
        _
    $region12: #{_basic_block_impl.4} parent=5 // pred_fallthru
      _
    %p227 = scmp.lt.s32.totalorder %s14, 2
    // Predicated region
    $region33: #{_basic_block_impl.4} parent=5 // pred_check
      %p228 = pneg %p227
    $region34: #{_basic_block_impl.4} parent=5 // pred_check_branch
      %230 = sbr.rel (%p228) target = $region36
    $region35: #{_basic_block_impl.4} parent=5 // pred_region
      // Predicated region
      $region37: #{_basic_block_impl.4} parent=35 // pred_check
        %p231 = pneg %p34
      $region38: #{_basic_block_impl.4} parent=35 // pred_check_branch
        %233 = sbr.rel (%p231) target = $region40
      $region39: #{_basic_block_impl.4} parent=35 // pred_region
        %p234 = scmp.lt.s32.totalorder %s14, 1
        %s235 = scalar_select %p234, %s14, 1
        %s236 = smul.addr %s235, 3
        %s237 = smul.addr %s236, 4
        %s238 = scalar_lea.vmem %s0, %s237
      $region40: #{_basic_block_impl.4} parent=35 // pred_fallthru
        _
    $region36: #{_basic_block_impl.4} parent=5 // pred_fallthru
      _
    %p239 = scmp.le.s32.totalorder 1, %s14
    %p240 = scmp.lt.s32.totalorder %s14, 3
    %p241 = pnand %p239, %p240
    %p242 = pneg %p241
    // Predicated region
    $region41: #{_basic_block_impl.4} parent=5 // pred_check
      _
    $region42: #{_basic_block_impl.4} parent=5 // pred_check_branch
      %244 = sbr.rel (%p241) target = $region44
    $region43: #{_basic_block_impl.4} parent=5 // pred_region
      %s245 = ssub.s32 %s14, 1
      %p246 = scmp.lt.s32.totalorder %s19, 1
      %s247 = scalar_select %p246, %s19, 1
      %s248 = smul.addr %s247, 3
      %s249 = smul.addr %s248, 4
      %s250 = scalar_lea.vmem %s0, %s249
      %p251 = pneg %p40
      %p252 = pneg %p37
      %p253 = pneg %p61
      %p254 = pneg %p58
      %p255 = pneg %p82
      %p256 = pneg %p79
      %p257 = pneg %p103
      %p258 = pneg %p100
      %p259 = pneg %p124
      %p260 = pneg %p121
      %p261 = pneg %p145
      %p262 = pneg %p142
      %p263 = pneg %p171
      %p264 = pneg %p168
      %p265 = scmp.lt.s32.totalorder %s19, 1
      %s266 = scalar_select %p265, %s19, 1
      %s267 = smul.addr %s266, 3
      %s268 = smul.addr %s267, 4
      %s269 = scalar_lea.vmem %s6, %s268
      %p270 = pneg %p197
      %p271 = pneg %p194
      %p272 = scmp.lt.s32.totalorder %s19, 1
      %s273 = scalar_select %p272, %s19, 1
      %s274 = smul.addr %s273, 4
      %s275 = scalar_lea.vmem %s7, %s274
      %p276 = scmp.lt.s32.totalorder %s19, 1
      %s277 = scalar_select %p276, %s19, 1
      %s278 = smul.addr %s277, 3
      %s279 = smul.addr %s278, 4
      %s280 = scalar_lea.vmem %s0, %s279
      %p281 = scmp.lt.s32.totalorder %s19, 1
      %s282 = scalar_select %p281, %s19, 1
      %s283 = smul.addr %s282, 3
      %s284 = smul.addr %s283, 4
      %s285 = scalar_lea.vmem %s6, %s284
      %p286 = scmp.lt.s32.totalorder %s19, 1
      %s287 = scalar_select %p286, %s19, 1
      %s288 = smul.addr %s287, 4
      %s289 = scalar_lea.vmem %s7, %s288
      %v291 = vld [vmem:[%s1] sm:$0xf]
      %v292 = vmul.f32 %v291, 0.001953125
      %v293 = vmul.f32 %v292, %v292
      %295 = vrot.lane.b32.xlu0 %v293, 1
      %v296 = vpop.permute.xlu0 %295
      %v298 = vsub.f32 %v292, %v296
      %v299 = vld [vmem:[%s2] sm:$0xf]
      %v300 = vadd.f32 %v298, 1e-05
      %v301 = vrsqrt.pop %v300
      %v302 = vmul.f32 %v301, %v300
      %v303 = vmul.f32 %v302, %v301
      %v304 = vmul.f32 0.5, %v303
      %v305 = vsub.f32 1.5, %v304
      %v306 = vmul.f32 %v301, %v305
      %vm307 = vweird.f32 %v300
      %vm308 = vweird.f32 %v301
      %vm309 = vmor %vm307, %vm308
      %v310 = vsel %vm309, %v301, %v306
      %312 = vrot.lane.b32.xlu0 %v310, 127
      %v313 = vpop.permute.xlu0 %312
      %v315 = vmul.f32 %v299, %v313
      %v316 = vld [vmem:[%s3] sm:$0xf]
      %v317 = vmul.f32 %v292, %v315
      %v318 = vsub.f32 %v316, %v317
      %v319 = vld [vmem:[%s4] sm:$0x7]
      %v320 = vld [vmem:[%s280] sm:$0xff]
      %v321 = vld [vmem:[%s280 + $0x8] sm:$0xf]
      %323 = vset.pattern.permute.xlu0 0
      %324 = vperm.xlu0 %323, %v315
      %v325 = vpop.permute.xlu0 %324
      %v327 = vunpack.c.l.s4 839922192
      %v328 = vunpack.c.0.s8 %v327
      %v329 = vperm.slane %v325, %v328
      %v331 = vmul.f32 %v320, %v329
      %v332 = vmul.f32 %v321, %v329
      %334 = vset.pattern.permute.xlu0 0
      %335 = vperm.xlu0 %334, %v318
      %v336 = vpop.permute.xlu0 %335
      %v338 = vunpack.c.l.s4 839922192
      %v339 = vunpack.c.0.s8 %v338
      %v340 = vperm.slane %v336, %v339
      %v342 = vadd.f32 %v331, %v340
      %v343 = vadd.f32 %v332, %v340
      %v344 = vmax.f32 %v342, 0.0
      %v345 = vmax.f32 %v343, 0.0
      %v347 = vperm.slane %v319, 0
      %v348 = vperm.slane %v319, 1
      %v349 = vperm.slane %v319, 2
      %v353 = vrot.slane %v348, 4
      %vm354 = vcmask 1043456
      %v355 = vsel %vm354, %v347, %v353
      %v357 = vmul.f32 %v344, %v355
      %v358 = vmul.f32 %v345, %v349
      %vm359 = vcmask 1041408
      %vm360 = vcmask 1043458
      %vm361 = vmor %vm360, %vm359
      %vm362 = vcmask 570372
      %vm363 = vmor %vm362, %vm361
      %364 = vst.msk [vmem:[#allocation2] sm:$0x3f] %vm363, 0
      %367 = vst [vmem:[#allocation1] ss:$2 sm:$0xff] %v357
      %s368 = scalar_lea.vmem [#allocation1], 16
      %369 = vst [vmem:[%s368] ss:$2 sm:$0xff] %v358
      %v370 = vld.sshfl [vmem:[#allocation1] sm:$0xff pattern:$0x75316420]
      %v371 = vld.sshfl [vmem:[#allocation1 + $0x8] sm:$0xff pattern:$0x75316420]
      %v372 = vld.sshfl [vmem:[#allocation1 + $0x10] sm:$0xff pattern:$0x75316420]
      %v376 = vpack.c.bf16 %v371, %v370
      %v377 = vpack.c.bf16 %v372, %v372
      %v380 = vrot.slane %v376, 2
      %v381 = vrot.slane %v377, 4
      %v382 = vrot.slane %v377, 6
      %v385 = vsel %vm359, %v376, %v380
      %vm386 = vcmask 1045508
      %v389 = vsel %vm386, %v381, %v382
      %v390 = vsel %vm354, %v385, %v389
      %392 = vrot.lane.b32.xlu0 %v390, 19
      %v393 = vpop.permute.xlu0 %392
      %v394 = vrot.slane %v393, 6
      %vm395 = vcmask 154624
      %v396 = vsel %vm395, %v394, %v393
      %vm398 = vcmask 1041560
      %vm399 = vmor %vm360, %vm398
      %vm400 = vcmask 414724
      %vm401 = vmor %vm400, %vm399
      %402 = vst.msk [vmem:[#allocation2] sm:$0x3f] %vm401, %v396
      %v403 = vld [vmem:[#allocation2] sm:$0x3f]
      %405 = vst [vmem:[#allocation1] ss:$2 sm:$0xff] %v403
      %v406 = vld.sshfl [vmem:[#allocation1] sm:$0xff pattern:$0x75643120]
      %v407 = vld.sshfl [vmem:[#allocation1 + $0x8] sm:$0xff pattern:$0x75643120]
      %410 = vst [vmem:[#allocation3] sm:$0x33] %v406
      %vm411 = vcmask 254976
      %412 = vst.msk [vmem:[#allocation3 + $0x8] sm:$0x3] %vm411, %v407
      %v413 = vld [vmem:[#allocation2] sm:$0x3f]
      %s415 = scalar_lea.vmem [#allocation1], 1
      %416 = vst [vmem:[%s415] ss:$2 sm:$0xff] %v413
      %v417 = vld.sshfl [vmem:[#allocation1] sm:$0xff pattern:$0x75643120]
      %v419 = vld.sshfl [vmem:[#allocation1 + $0x8] sm:$0xff pattern:$0x75643120]
      %421 = vrot.lane.b32.xlu0 %v417, 127
      %v422 = vpop.permute.xlu0 %421
      %423 = vrot.lane.b32.xlu0 %v419, 127
      %v424 = vpop.permute.xlu0 %423
      %v425 = vrot.slane %v422, 4
      %v426 = vrot.slane %v424, 4
      %vm427 = vcmask 1043456
      %v428 = vsel %vm427, %v425, %v426
      %vm429 = vcmask 1039360
      %v430 = vsel %vm429, %v422, %v428
      %433 = vst [vmem:[#allocation3] sm:$0xcc] %v430
      %vm434 = vcmask 257026
      %435 = vst.msk [vmem:[#allocation3 + $0x8] sm:$0xc] %vm434, %v424
      %v436 = vld [vmem:[#allocation2] sm:$0x3f]
      %438 = vst [vmem:[#allocation1] ss:$2 sm:$0xff] %v436
      %v439 = vld.sshfl [vmem:[#allocation1] sm:$0xff pattern:$0x75643120]
      %v441 = vld.sshfl [vmem:[#allocation1 + $0x8] sm:$0xff pattern:$0x75643120]
      %443 = vrot.lane.b32.xlu0 %v439, 126
      %v444 = vpop.permute.xlu0 %443
      %445 = vrot.lane.b32.xlu0 %v441, 126
      %v446 = vpop.permute.xlu0 %445
      %v447 = vrot.slane %v444, 4
      %v448 = vrot.slane %v446, 4
      %v449 = vsel %vm427, %v447, %v448
      %vm450 = vcmask 1031168
      %v451 = vsel %vm450, %v444, %v449
      %454 = vst [vmem:[#allocation3 + $0xc] sm:$0x33] %v451
      %455 = vst.msk [vmem:[#allocation3 + $0x14] sm:$0x3] %vm411, %v446
      %v456 = vld [vmem:[#allocation2] sm:$0x3f]
      %s458 = scalar_lea.vmem [#allocation1], 1
      %459 = vst [vmem:[%s458] ss:$2 sm:$0xff] %v456
      %v460 = vld.sshfl [vmem:[#allocation1] sm:$0xff pattern:$0x75643120]
      %v462 = vld.sshfl [vmem:[#allocation1 + $0x8] sm:$0xff pattern:$0x75643120]
      %464 = vrot.lane.b32.xlu0 %v460, 110
      %v465 = vpop.permute.xlu0 %464
      %466 = vrot.lane.b32.xlu0 %v462, 110
      %v467 = vpop.permute.xlu0 %466
      %v468 = vrot.slane %v465, 4
      %v469 = vrot.slane %v467, 4
      %v470 = vsel %vm427, %v468, %v469
      %vm471 = vcmask 900096
      %v472 = vsel %vm471, %v465, %v470
      %475 = vst [vmem:[#allocation3 + $0xc] sm:$0xcc] %v472
      %476 = vst.msk [vmem:[#allocation3 + $0x14] sm:$0xc] %vm434, %v467
      %v477 = vld [vmem:[#allocation2] sm:$0x3f]
      %479 = vst [vmem:[#allocation1] ss:$2 sm:$0xff] %v477
      %v480 = vld.sshfl [vmem:[#allocation1] sm:$0xff pattern:$0x75643120]
      %v482 = vld.sshfl [vmem:[#allocation1 + $0x8] sm:$0xff pattern:$0x75643120]
      %484 = vrot.lane.b32.xlu0 %v480, 109
      %v485 = vpop.permute.xlu0 %484
      %486 = vrot.lane.b32.xlu0 %v482, 109
      %v487 = vpop.permute.xlu0 %486
      %v488 = vrot.slane %v485, 4
      %v489 = vrot.slane %v487, 4
      %v490 = vsel %vm427, %v488, %v489
      %vm491 = vcmask 891904
      %v492 = vsel %vm491, %v485, %v490
      %495 = vst [vmem:[#allocation3 + $0x18] sm:$0x33] %v492
      %496 = vst.msk [vmem:[#allocation3 + $0x20] sm:$0x3] %vm411, %v487
      %v497 = vld [vmem:[#allocation2] sm:$0x3f]
      %s499 = scalar_lea.vmem [#allocation1], 1
      %500 = vst [vmem:[%s499] ss:$2 sm:$0xff] %v497
      %v501 = vld.sshfl [vmem:[#allocation1] sm:$0xff pattern:$0x75643120]
      %v503 = vld.sshfl [vmem:[#allocation1 + $0x8] sm:$0xff pattern:$0x75643120]
      %505 = vrot.lane.b32.xlu0 %v501, 108
      %v506 = vpop.permute.xlu0 %505
      %507 = vrot.lane.b32.xlu0 %v503, 108
      %v508 = vpop.permute.xlu0 %507
      %v509 = vrot.slane %v506, 4
      %v510 = vrot.slane %v508, 4
      %v511 = vsel %vm427, %v509, %v510
      %vm512 = vcmask 883712
      %v513 = vsel %vm512, %v506, %v511
      %516 = vst [vmem:[#allocation3 + $0x18] sm:$0xcc] %v513
      %517 = vst.msk [vmem:[#allocation3 + $0x20] sm:$0xc] %vm434, %v508
      %v518 = vld [vmem:[#allocation2] sm:$0x3f]
      %520 = vst [vmem:[#allocation1] ss:$2 sm:$0xff] %v518
      %v521 = vld.sshfl [vmem:[#allocation1] sm:$0xff pattern:$0x75643120]
      %v523 = vld.sshfl [vmem:[#allocation1 + $0x8] sm:$0xff pattern:$0x75643120]
      %525 = vrot.lane.b32.xlu0 %v521, 92
      %v526 = vpop.permute.xlu0 %525
      %527 = vrot.lane.b32.xlu0 %v523, 92
      %v528 = vpop.permute.xlu0 %527
      %v529 = vrot.slane %v526, 4
      %v530 = vrot.slane %v528, 4
      %v531 = vsel %vm427, %v529, %v530
      %vm532 = vcmask 752640
      %v533 = vsel %vm532, %v526, %v531
      %536 = vst [vmem:[#allocation3 + $0x24] sm:$0x33] %v533
      %537 = vst.msk [vmem:[#allocation3 + $0x2c] sm:$0x3] %vm411, %v528
      %v538 = vld [vmem:[#allocation2] sm:$0x3f]
      %s540 = scalar_lea.vmem [#allocation1], 1
      %541 = vst [vmem:[%s540] ss:$2 sm:$0xff] %v538
      %v542 = vld.sshfl [vmem:[#allocation1] sm:$0xff pattern:$0x75643120]
      %v544 = vld.sshfl [vmem:[#allocation1 + $0x8] sm:$0xff pattern:$0x75643120]
      %546 = vrot.lane.b32.xlu0 %v542, 91
      %v547 = vpop.permute.xlu0 %546
      %548 = vrot.lane.b32.xlu0 %v544, 91
      %v549 = vpop.permute.xlu0 %548
      %v550 = vrot.slane %v547, 4
      %v551 = vrot.slane %v549, 4
      %v552 = vsel %vm427, %v550, %v551
      %vm553 = vcmask 744448
      %v554 = vsel %vm553, %v547, %v552
      %557 = vst [vmem:[#allocation3 + $0x24] sm:$0xcc] %v554
      %558 = vst.msk [vmem:[#allocation3 + $0x2c] sm:$0xc] %vm434, %v549
      %v559 = vld [vmem:[#allocation2] sm:$0x3f]
      %561 = vst [vmem:[#allocation1] ss:$2 sm:$0xff] %v559
      %v562 = vld.sshfl [vmem:[#allocation1] sm:$0xff pattern:$0x75643120]
      %v564 = vld.sshfl [vmem:[#allocation1 + $0x8] sm:$0xff pattern:$0x75643120]
      %566 = vrot.lane.b32.xlu0 %v562, 90
      %v567 = vpop.permute.xlu0 %566
      %568 = vrot.lane.b32.xlu0 %v564, 90
      %v569 = vpop.permute.xlu0 %568
      %v570 = vrot.slane %v567, 4
      %v571 = vrot.slane %v569, 4
      %v572 = vsel %vm427, %v570, %v571
      %vm573 = vcmask 736256
      %v574 = vsel %vm573, %v567, %v572
      %577 = vst [vmem:[#allocation3 + $0x30] sm:$0x33] %v574
      %578 = vst.msk [vmem:[#allocation3 + $0x38] sm:$0x3] %vm411, %v569
      %v579 = vld [vmem:[%s5] sm:$0x3]
      %v580 = vld [vmem:[#allocation3] sm:$0xff]
      %v581 = vld [vmem:[#allocation3 + $0x8] sm:$0xf]
      %v582 = vld [vmem:[#allocation3 + $0xc] sm:$0xff]
      %v583 = vld [vmem:[#allocation3 + $0x14] sm:$0xf]
      %v584 = vld [vmem:[#allocation3 + $0x18] sm:$0xff]
      %v585 = vld [vmem:[#allocation3 + $0x20] sm:$0xf]
      %v586 = vld [vmem:[#allocation3 + $0x24] sm:$0xff]
      %v587 = vld [vmem:[#allocation3 + $0x2c] sm:$0xf]
      %v588 = vld [vmem:[#allocation3 + $0x30] sm:$0x33]
      %v589 = vld [vmem:[#allocation3 + $0x38] sm:$0x3]
      %v600 = vunpack.c.l.b16 %v580
      %v601 = vunpack.c.h.b16 %v580
      %v602 = vunpack.c.l.b16 %v581
      %v603 = vunpack.c.l.b16 %v582
      %v604 = vunpack.c.h.b16 %v582
      %v605 = vunpack.c.l.b16 %v583
      %v606 = vunpack.c.l.b16 %v584
      %v607 = vunpack.c.h.b16 %v584
      %v608 = vunpack.c.l.b16 %v585
      %v609 = vunpack.c.l.b16 %v586
      %v610 = vunpack.c.h.b16 %v586
      %v611 = vunpack.c.l.b16 %v587
      %v612 = vunpack.c.l.b16 %v588
      %v613 = vunpack.c.h.b16 %v588
      %v614 = vunpack.c.l.b16 %v589
      %v615 = vpack.c.b16 %v603, %v600
      %v616 = vpack.c.b16 %v604, %v601
      %v617 = vpack.c.b16 %v605, %v602
      %v618 = vpack.c.b16 %v609, %v606
      %v619 = vpack.c.b16 %v610, %v607
      %v620 = vpack.c.b16 %v611, %v608
      %v621 = vpack.c.b16 %v612, %v612
      %v622 = vpack.c.b16 %v613, %v613
      %v623 = vpack.c.b16 %v614, %v614
      %vm630 = vcmask 293888
      %v632 = vsel %vm630, %v579, 0
      %v635 = vsel %vm359, %v621, 0
      %v638 = vsel %vm359, %v622, 0
      %v641 = vsel %vm359, %v623, 0
      %643 = vmatpush.bf16.msra.mxu0 0
      %644 = vmatpush.bf16.msra.mxu0 0
      %645 = vmatpush.bf16.msra.mxu0 0
      %646 = vmatpush.bf16.msra.mxu0 0
      %647 = vmatpush.bf16.msra.mxu0 0
      %648 = vmatpush.bf16.msra.mxu0 %v635
      %649 = vmatpush.bf16.msra.mxu0 %v618
      %650 = vmatpush.bf16.msra.mxu0 %v615
      %651 = vmatmul.bf16.gmra.mxu0 %v632
      %v652 = vpop.f32.mrf.mxu0
      %v653 = vadd.f32 0.0, %v652
      %v654 = vpop.f32.mrf.mxu0
      %655 = vdwg.mxu0
      %656 = vmatpush.bf16.msra.mxu0 0
      %657 = vmatpush.bf16.msra.mxu0 0
      %658 = vmatpush.bf16.msra.mxu0 0
      %659 = vmatpush.bf16.msra.mxu0 0
      %660 = vmatpush.bf16.msra.mxu0 0
      %661 = vmatpush.bf16.msra.mxu0 %v638
      %662 = vmatpush.bf16.msra.mxu0 %v619
      %663 = vmatpush.bf16.msra.mxu0 %v616
      %664 = vmatmul.bf16.gmra.mxu0 %v632
      %v665 = vpop.f32.mrf.mxu0
      %v666 = vadd.f32 0.0, %v665
      %v667 = vpop.f32.mrf.mxu0
      %668 = vdwg.mxu0
      %669 = vmatpush.bf16.msra.mxu0 0
      %670 = vmatpush.bf16.msra.mxu0 0
      %671 = vmatpush.bf16.msra.mxu0 0
      %672 = vmatpush.bf16.msra.mxu0 0
      %673 = vmatpush.bf16.msra.mxu0 0
      %674 = vmatpush.bf16.msra.mxu0 %v641
      %675 = vmatpush.bf16.msra.mxu0 %v620
      %676 = vmatpush.bf16.msra.mxu0 %v617
      %677 = vmatmul.bf16.gmra.mxu0 %v632
      %v678 = vpop.f32.mrf.mxu0
      %v679 = vadd.f32 0.0, %v678
      %v680 = vpop.f32.mrf.mxu0
      %681 = vdwg.mxu0
      %v684 = vrot.slane %v666, 4
      %v685 = vsel %vm354, %v653, %v684
      %687 = vst [vmem:[%s285] sm:$0xff] %v685
      %vm688 = vcmask 257024
      %689 = vst.msk [vmem:[%s285 + $0x8] sm:$0xf] %vm688, %v679
      %v690 = vmul.f32 %v653, %v347
      %v691 = vmul.f32 %v666, %v348
      %v692 = vmul.f32 %v679, %v349
      %v693 = vsel %vm354, %v690, 0.0
      %v694 = vsel %vm354, %v691, 0.0
      %v695 = vadd.f32 %v693, %v694
      %v696 = vsel %vm688, %v692, 0.0
      %v697 = vadd.f32 %v695, %v696
      %698 = vadd.xlane.f32.xlu0 %v697
      %v699 = vpop.xlane.xlu0 %698
      %v700 = vmul.f32 %v690, %v653
      %v701 = vmul.f32 %v691, %v666
      %v702 = vmul.f32 %v692, %v679
      %v703 = vsel %vm354, %v700, 0.0
      %v704 = vsel %vm354, %v701, 0.0
      %v705 = vadd.f32 %v703, %v704
      %v706 = vsel %vm688, %v702, 0.0
      %v707 = vadd.f32 %v705, %v706
      %708 = vadd.xlane.f32.xlu0 %v707
      %v709 = vpop.xlane.xlu0 %708
      %vm710 = vcmask 7168
      %v711 = vsel %vm710, %v699, %v709
      %vm712 = vcmask 11264
      %713 = vst.msk [vmem:[%s289] sm:$0xf] %vm712, %v711
      %p714 = scmp.lt.s32.totalorder %s19, 1
      %s715 = scalar_select %p714, %s19, 1
      %s716 = smul.addr %s715, 3
      %s717 = smul.addr %s716, 4
      %s718 = scalar_lea.vmem %s6, %s717
      %p719 = scmp.lt.s32.totalorder %s19, 1
      %s720 = scalar_select %p719, %s19, 1
      %s721 = smul.addr %s720, 4
      %s722 = scalar_lea.vmem %s7, %s721
      // Predicated region
      $region45: #{_basic_block_impl.4} parent=43 // pred_check
        %p723 = pneg %p168
      $region46: #{_basic_block_impl.4} parent=43 // pred_check_branch
        %725 = sbr.rel (%p723) target = $region48
      $region47: #{_basic_block_impl.4} parent=43 // pred_region
        _
      $region48: #{_basic_block_impl.4} parent=43 // pred_fallthru
        _
      // Predicated region
      $region49: #{_basic_block_impl.4} parent=43 // pred_check
        %p726 = pneg %p194
      $region50: #{_basic_block_impl.4} parent=43 // pred_check_branch
        %728 = sbr.rel (%p726) target = $region52
      $region51: #{_basic_block_impl.4} parent=43 // pred_region
        _
      $region52: #{_basic_block_impl.4} parent=43 // pred_fallthru
        _
    $region44: #{_basic_block_impl.4} parent=5 // pred_fallthru
      _
    %p729 = scmp.le.s32.totalorder 2, %s14
    // Predicated region
    $region53: #{_basic_block_impl.4} parent=5 // pred_check
      %p730 = pneg %p729
    $region54: #{_basic_block_impl.4} parent=5 // pred_check_branch
      %732 = sbr.rel (%p730) target = $region56
    $region55: #{_basic_block_impl.4} parent=5 // pred_region
      %s733 = ssub.s32 %s14, 2
      // Predicated region
      $region57: #{_basic_block_impl.4} parent=55 // pred_check
        %p734 = pneg %p174
      $region58: #{_basic_block_impl.4} parent=55 // pred_check_branch
        %736 = sbr.rel (%p734) target = $region60
      $region59: #{_basic_block_impl.4} parent=55 // pred_region
        %p737 = scmp.lt.s32.totalorder %s20, 1
        %s738 = scalar_select %p737, %s20, 1
        %s739 = smul.addr %s738, 3
        %s740 = smul.addr %s739, 4
        %s741 = scalar_lea.vmem %s6, %s740
      $region60: #{_basic_block_impl.4} parent=55 // pred_fallthru
        _
      // Predicated region
      $region61: #{_basic_block_impl.4} parent=55 // pred_check
        %p742 = pneg %p200
      $region62: #{_basic_block_impl.4} parent=55 // pred_check_branch
        %744 = sbr.rel (%p742) target = $region64
      $region63: #{_basic_block_impl.4} parent=55 // pred_region
        %p745 = scmp.lt.s32.totalorder %s20, 1
        %s746 = scalar_select %p745, %s20, 1
        %s747 = smul.addr %s746, 4
        %s748 = scalar_lea.vmem %s7, %s747
      $region64: #{_basic_block_impl.4} parent=55 // pred_fallthru
        _
    $region56: #{_basic_block_impl.4} parent=5 // pred_fallthru
      _
  $region6: #{_basic_block_impl.4} parent=0 // loop_footer
    %s18 = sadd.s32 1, %s14
  $region7: #{_basic_block_impl.4} parent=0 // loop_footer_branch
    %13 = sbr.rel target = $region3
  $region8: #{_basic_block_impl.4} parent=0 // loop_exit
    _

</llo_original>
